<compile_context>
chip_gen: v7x
topology: tpu7x:2x2x1
jax: 0.10.0
libtpu: 0.0.40
codegen_flags: <defaults>
</compile_context>

<pallas_src>
import functools

import numpy as np
import jax
import jax.numpy as jnp
from jax.experimental import pallas as pl
from jax.experimental.pallas import tpu as pltpu


def _convt_stats_kernel(x_ref, w_ref, y_ref, stats_ref):
    """Sub-pixel ConvTranspose tile.

    x_ref:     ((H+2)*W_p, 2*CI)  column-pair input, whole sample for (b, n).
    w_ref:     (4, 2*CI, co_p)    tap weights (a, dh) for this column parity b.
    y_ref:     (tile_h, W_p, co_p) bf16 pre-BN output block for (n, t, a, b).
    stats_ref: (2, co_p)          partial (sum, sumsq) for BatchNorm.
    """
    tile_h, w_p, co_p = y_ref.shape
    m = tile_h * w_p
    a = pl.program_id(2)
    t = pl.program_id(3)

    acc = None
    for dh in range(2):                                  # two row taps
        start = pl.multiple_of((t * tile_h + a + dh) * w_p, 8)
        lhs = x_ref[pl.ds(start, m), :]                  # (m, 2*CI) bf16
        part = jnp.dot(lhs, w_ref[a * 2 + dh],
                       preferred_element_type=jnp.float32)   # MXU, f32 acc
        acc = part if acc is None else acc + part

    # W_p is a multiple of 8, so this split of the sublane dim is layout-free.
    y_ref[...] = acc.reshape(tile_h, w_p, co_p).astype(y_ref.dtype)
    # Two direct sub-slice stores (no concatenate relayout).
    stats_ref[0:1, :] = jnp.sum(acc, axis=0, keepdims=True)
    stats_ref[1:2, :] = jnp.sum(acc * acc, axis=0, keepdims=True)


def _affine_relu_kernel(y_ref, ss_ref, o_ref):
    """Fused BN + Dropout2d + ReLU: out = max(y*scale + shift, 0), bf16 out."""
    y = y_ref[...].astype(jnp.float32)
    o_ref[...] = jnp.maximum(y * ss_ref[0, :] + ss_ref[1, :], 0.0).astype(o_ref.dtype)


def _pick_tile_rows(h, w_p, max_rows):
    """Largest divisor tile of h with tile * w_p <= max_rows (always >= 1 row)."""
    cands = [t for t in range(1, h + 1) if h % t == 0 and t * w_p <= max_rows]
    return max(cands) if cands else 1


@functools.partial(jax.jit,
                   static_argnames=("stride", "padding", "eps",
                                    "tile_rows_p1", "tile_rows_p2"))
def decoder_block_forward(x, w_t, bias, gamma, beta, drop_nc, *,
                          stride=2, padding=1, eps=1e-5,
                          tile_rows_p1=1024, tile_rows_p2=4096):
    """x: (N, CI, H, W) NCHW.  w_t: (CI, CO, 4, 4) torch ConvTranspose2d layout.
    `bias` is accepted for API parity but cancels exactly in training-mode
    BatchNorm, so it never touches the kernels (only valid for batch stats)."""
    del bias
    N, CI, H, W = x.shape
    CI2, CO, K, K2 = w_t.shape
    assert CI == CI2 and K == 4 and K2 == 4 and stride == 2 and padding == 1, (
        "sub-pixel decomposition is specialized to k=4, s=2, p=1")
    OH, OW = 2 * H, 2 * W
    co_p = ((CO + 127) // 128) * 128            # lane-dense output channels
    w_p = ((W + 7) // 8) * 8                    # sublane-aligned flat row stride
    ci2 = 2 * CI                                # column-pair contraction dim
    # TODO(synk): pad ci2 to a multiple of 128 for lane-dense A loads when CI
    # is not already a multiple of 64 (all realistic pix2pix blocks are).

    # Tiles (rows of the flattened tile_h * W_p spatial axis), VMEM-bounded so
    # v5e's 16 MiB scoped default still fits once raised to 32 MiB below.
    cap1 = max(w_p, (1 << 20) // max(co_p, ci2))
    tile_h1 = _pick_tile_rows(H, w_p, min(tile_rows_p1, cap1))
    n_t1 = H // tile_h1
    cap2 = max(w_p, (512 * 1024) // co_p)
    tile_h2 = _pick_tile_rows(H, w_p, min(tile_rows_p2, cap2))
    n_t2 = H // tile_h2

    # --- column-pair input (≈4x input in HBM; the old 16-tap im2col was 16x).
    # Rows are flattened with stride w_p so every in-kernel row-tap slice
    # starts at a multiple of 8 sublanes; padded columns are exact zeros so
    # they contribute 0 to the BN sums and are sliced away at the end.
    # TODO(synk): stream x_pad with a halo'd manual-DMA pipeline to cut this
    # remaining duplication to 1x.
    xt = jnp.transpose(x, (0, 2, 3, 1))                                # NHWC
    x_pad = jnp.pad(xt, ((0, 0), (1, 1), (1, 1), (0, 0)))              # (N,H+2,W+2,CI)
    xcat = jnp.stack(
        [jnp.concatenate([x_pad[:, :, b:b + W, :],
                          x_pad[:, :, b + 1:b + 1 + W, :]], axis=-1)
         for b in range(2)], axis=0)                                    # (2,N,H+2,W,2CI)
    if w_p != W:
        xcat = jnp.pad(xcat, ((0, 0), (0, 0), (0, 0), (0, w_p - W), (0, 0)))
    s_p = (H + 2) * w_p
    xcat = xcat.reshape(2, N, s_p, ci2).astype(jnp.bfloat16)

    # --- per-(b, a, dh) 2x2 sub-kernels, the dw taps folded into the 2*CI rows.
    wsub = []
    for b in range(2):
        taps = []
        for a in range(2):
            for dh in range(2):
                taps.append(jnp.concatenate(
                    [w_t[:, :, 3 - a - 2 * dh, 3 - b],
                     w_t[:, :, 3 - a - 2 * dh, 3 - b - 2]], axis=0))    # (2CI, CO)
        wsub.append(jnp.stack(taps, axis=0))                            # (4, 2CI, CO)
    w_cat = jnp.zeros((2, 4, ci2, co_p), jnp.float32)
    w_cat = w_cat.at[..., :CO].set(jnp.stack(wsub, axis=0)).astype(jnp.bfloat16)

    # --- pass 1: sub-pixel matmuls + partial BN stats.  Grid (b, n, a, t):
    # the per-sample x block is fetched once per (b, n); tap weights once per b.
    grid1 = (2, N, 2, n_t1)
    y5, part_stats = pl.pallas_call(
        _convt_stats_kernel,
        grid=grid1,
        in_specs=[
            pl.BlockSpec((None, None, s_p, ci2), lambda b, n, a, t: (b, n, 0, 0)),
            pl.BlockSpec((None, 4, ci2, co_p), lambda b, n, a, t: (b, 0, 0, 0)),
        ],
        out_specs=[
            pl.BlockSpec((None, tile_h1, None, w_p, co_p),
                         lambda b, n, a, t: (n, t, a, 0, b)),
            pl.BlockSpec((None, None, None, None, 2, co_p),
                         lambda b, n, a, t: (b, a, n, t, 0, 0)),
        ],
        out_shape=(
            jax.ShapeDtypeStruct((N, H, 2, w_p, 2 * co_p), jnp.bfloat16),
            jax.ShapeDtypeStruct((2, 2, N, n_t1, 2, co_p), jnp.float32),
        ),
        compiler_params=pltpu.CompilerParams(
            dimension_semantics=("parallel", "parallel", "parallel", "parallel"),
            vmem_limit_bytes=32 * 1024 * 1024),
    )(xcat, w_cat)

    # --- tiny wrapper-side reduction + BN/Dropout folding (O(N*CO) values).
    stats = jnp.sum(part_stats, axis=(0, 1, 2, 3))                      # (2, co_p)
    count = float(N * OH * OW)
    mean = stats[0] / count
    var = jnp.maximum(stats[1] / count - mean * mean, 0.0)              # biased var
    inv_std = jax.lax.rsqrt(var + eps)
    g = jnp.zeros((co_p,), jnp.float32).at[:CO].set(gamma) * inv_std
    bta = jnp.zeros((co_p,), jnp.float32).at[:CO].set(beta)
    d = jnp.zeros((N, co_p), jnp.float32).at[:, :CO].set(drop_nc)
    scale = g[None, :] * d                                              # (N, co_p)
    shift = (bta - mean * g)[None, :] * d                               # (N, co_p)
    ss = jnp.stack([scale, shift], axis=1)                              # (N, 2, co_p)
    ss = jnp.concatenate([ss, ss], axis=-1)                             # match y5's
                                                                        # (b, c) last axis

    # --- pass 2: memory-bound fused scale/shift + ReLU, bf16 out, large tiles
    # covering all 4 parities per block, single fused scale/shift operand.
    grid2 = (N, n_t2)
    out5 = pl.pallas_call(
        _affine_relu_kernel,
        grid=grid2,
        in_specs=[
            pl.BlockSpec((None, tile_h2, 2, w_p, 2 * co_p),
                         lambda n, t: (n, t, 0, 0, 0)),
            pl.BlockSpec((None, 2, 2 * co_p), lambda n, t: (n, 0, 0)),
        ],
        out_specs=pl.BlockSpec((None, tile_h2, 2, w_p, 2 * co_p),
                               lambda n, t: (n, t, 0, 0, 0)),
        out_shape=jax.ShapeDtypeStruct((N, H, 2, w_p, 2 * co_p), jnp.bfloat16),
        compiler_params=pltpu.CompilerParams(
            dimension_semantics=("parallel", "parallel"),
            vmem_limit_bytes=32 * 1024 * 1024),
    )(y5, ss)

    # --- FREE parity re-interleave (pure reshape), then the one unavoidable
    # XLA pass: width/channel slice + NHWC->NCHW transpose + f32 cast.
    out = out5.reshape(N, OH, 2 * w_p, co_p)[:, :, :OW, :CO]
    return jnp.transpose(out, (0, 3, 1, 2)).astype(jnp.float32)


def _reference(x, w_t, bias, gamma, beta, drop_nc, *, stride=2, padding=1, eps=1e-5):
    """Brute-force NumPy reference of the _DecoderBlock forward (training mode)."""
    x = np.asarray(x, np.float64)
    w_t = np.asarray(w_t, np.float64)
    bias = np.asarray(bias, np.float64)
    gamma = np.asarray(gamma, np.float64)
    beta = np.asarray(beta, np.float64)
    drop_nc = np.asarray(drop_nc, np.float64)

    N, CI, H, W = x.shape
    _, CO, K, _ = w_t.shape
    full = np.zeros((N, CO, (H - 1) * stride + K, (W - 1) * stride + K))
    for kh in range(K):
        for kw in range(K):
            contrib = np.einsum("nchw,cd->ndhw", x, w_t[:, :, kh, kw])
            full[:, :, kh:kh + stride * (H - 1) + 1:stride,
                       kw:kw + stride * (W - 1) + 1:stride] += contrib
    OH = (H - 1) * stride - 2 * padding + K
    OW = (W - 1) * stride - 2 * padding + K
    y = full[:, :, padding:padding + OH, padding:padding + OW]
    y = y + bias[None, :, None, None]

    mean = y.mean(axis=(0, 2, 3), keepdims=True)
    var = y.var(axis=(0, 2, 3), keepdims=True)            # biased variance
    bn = (y - mean) / np.sqrt(var + eps) * gamma[None, :, None, None] \
         + beta[None, :, None, None]
    bn = bn * drop_nc[:, :, None, None]
    return np.maximum(bn, 0.0)


if __name__ == "__main__":
    N, CI, CO, H, W, K = 2, 4, 8, 16, 16, 4
    stride, padding, p_drop = 2, 1, 0.5

    key = jax.random.PRNGKey(0)
    kx, kw, kb, kg, kbe, kd = jax.random.split(key, 6)
    x = jax.random.normal(kx, (N, CI, H, W), jnp.float32)
    w_t = 0.05 * jax.random.normal(kw, (CI, CO, K, K), jnp.float32)   # torch layout
    bias = 0.05 * jax.random.normal(kb, (CO,), jnp.float32)
    gamma = 1.0 + 0.1 * jax.random.normal(kg, (CO,), jnp.float32)
    beta = 0.1 * jax.random.normal(kbe, (CO,), jnp.float32)

    # Pre-round x / w to the kernel's bf16 compute precision so the f64
    # reference isolates kernel correctness (remaining deltas: f32 accumulation
    # order, bf16 storage of the intermediate + output, f32 BN statistics).
    x = x.astype(jnp.bfloat16).astype(jnp.float32)
    w_t = w_t.astype(jnp.bfloat16).astype(jnp.float32)

    # apply_dropout=True path: deterministic per-(sample, channel) Dropout2d mask.
    keep = jax.random.bernoulli(kd, 1.0 - p_drop, (N, CO))
    drop_nc = keep.astype(jnp.float32) / (1.0 - p_drop)

    out = decoder_block_forward(x, w_t, bias, gamma, beta, drop_nc,
                                stride=stride, padding=padding)
    out = jax.block_until_ready(out)

    assert out.shape == (N, CO, 2 * H, 2 * W), out.shape
    ref = _reference(x, w_t, bias, gamma, beta, drop_nc,
                     stride=stride, padding=padding)
    np.testing.assert_allclose(np.asarray(out), ref, rtol=1e-2, atol=1e-2)
    print("KERNEL_OK")
</pallas_src>

<mosaic_0001>
module attributes {stable_mosaic.version = 11 : i64} {
  func.func @_convt_stats_kernel(%arg0: i32, %arg1: i32, %arg2: i32, %arg3: i32, %arg4: memref<1x1x288x8xbf16, #tpu.memory_space<vmem>>, %arg5: memref<1x4x8x128xbf16, #tpu.memory_space<vmem>>, %arg6: memref<1x16x1x16x128xbf16, #tpu.memory_space<vmem>>, %arg7: memref<1x1x1x1x2x128xf32, #tpu.memory_space<vmem>>) attributes {dimension_semantics = [#tpu.dimension_semantics<parallel>, #tpu.dimension_semantics<parallel>, #tpu.dimension_semantics<parallel>, #tpu.dimension_semantics<parallel>], iteration_bounds = array<i64: 2, 2, 2, 1>, scalar_prefetch = 0 : i64, scratch_operands = 0 : i64, tpu.core_type = #tpu.core_type<tc>, window_params = [{transform_indices = @transform_0, window_bounds = array<i64: 1, 1, 288, 8>}, {transform_indices = @transform_1, window_bounds = array<i64: 1, 4, 8, 128>}, {transform_indices = @transform_2, window_bounds = array<i64: 1, 16, 1, 16, 128>}, {transform_indices = @transform_3, window_bounds = array<i64: 1, 1, 1, 1, 2, 128>}]} {
    %c16_i32 = arith.constant 16 : i32
    %0 = arith.muli %arg3, %c16_i32 : i32
    %1 = arith.addi %0, %arg2 : i32
    %c0_i32 = arith.constant 0 : i32
    %2 = arith.addi %1, %c0_i32 : i32
    %c16_i32_0 = arith.constant 16 : i32
    %3 = arith.muli %2, %c16_i32_0 : i32
    %4 = tpu.assume_multiple %3, 8 : i32
    %c0 = arith.constant 0 : index
    %c0_1 = arith.constant 0 : index
    %5 = arith.index_cast %4 : i32 to index
    %c0_2 = arith.constant 0 : index
    %6 = vector.load %arg4[%c0, %c0_1, %5, %c0_2] : memref<1x1x288x8xbf16, #tpu.memory_space<vmem>>, vector<1x1x256x8xbf16>
    %7 = vector.shape_cast %6 : vector<1x1x256x8xbf16> to vector<256x8xbf16>
    %c2_i32 = arith.constant 2 : i32
    %8 = arith.muli %arg2, %c2_i32 : i32
    %c0_i32_3 = arith.constant 0 : i32
    %9 = arith.addi %8, %c0_i32_3 : i32
    %c0_4 = arith.constant 0 : index
    %10 = arith.index_cast %9 : i32 to index
    %c0_5 = arith.constant 0 : index
    %c0_6 = arith.constant 0 : index
    %11 = vector.load %arg5[%c0_4, %10, %c0_5, %c0_6] : memref<1x4x8x128xbf16, #tpu.memory_space<vmem>>, vector<1x1x8x128xbf16>
    %12 = vector.shape_cast %11 : vector<1x1x8x128xbf16> to vector<8x128xbf16>
    %cst = arith.constant dense<0.000000e+00> : vector<256x128xf32>
    %13 = tpu.matmul %7, %12, %cst {dimension_numbers = #tpu.dot_dimension_numbers<[1], [0], [0], [1], [0, 0, 1, 1], [], []>} : vector<256x8xbf16>, vector<8x128xbf16>, vector<256x128xf32> -> vector<256x128xf32>
    %c16_i32_7 = arith.constant 16 : i32
    %14 = arith.muli %arg3, %c16_i32_7 : i32
    %15 = arith.addi %14, %arg2 : i32
    %c1_i32 = arith.constant 1 : i32
    %16 = arith.addi %15, %c1_i32 : i32
    %c16_i32_8 = arith.constant 16 : i32
    %17 = arith.muli %16, %c16_i32_8 : i32
    %18 = tpu.assume_multiple %17, 8 : i32
    %c0_9 = arith.constant 0 : index
    %c0_10 = arith.constant 0 : index
    %19 = arith.index_cast %18 : i32 to index
    %c0_11 = arith.constant 0 : index
    %20 = vector.load %arg4[%c0_9, %c0_10, %19, %c0_11] : memref<1x1x288x8xbf16, #tpu.memory_space<vmem>>, vector<1x1x256x8xbf16>
    %21 = vector.shape_cast %20 : vector<1x1x256x8xbf16> to vector<256x8xbf16>
    %c2_i32_12 = arith.constant 2 : i32
    %22 = arith.muli %arg2, %c2_i32_12 : i32
    %c1_i32_13 = arith.constant 1 : i32
    %23 = arith.addi %22, %c1_i32_13 : i32
    %c0_14 = arith.constant 0 : index
    %24 = arith.index_cast %23 : i32 to index
    %c0_15 = arith.constant 0 : index
    %c0_16 = arith.constant 0 : index
    %25 = vector.load %arg5[%c0_14, %24, %c0_15, %c0_16] : memref<1x4x8x128xbf16, #tpu.memory_space<vmem>>, vector<1x1x8x128xbf16>
    %26 = vector.shape_cast %25 : vector<1x1x8x128xbf16> to vector<8x128xbf16>
    %cst_17 = arith.constant dense<0.000000e+00> : vector<256x128xf32>
    %27 = tpu.matmul %21, %26, %cst_17 {dimension_numbers = #tpu.dot_dimension_numbers<[1], [0], [0], [1], [0, 0, 1, 1], [], []>} : vector<256x8xbf16>, vector<8x128xbf16>, vector<256x128xf32> -> vector<256x128xf32>
    %28 = arith.addf %13, %27 : vector<256x128xf32>
    %29 = vector.shape_cast %28 : vector<256x128xf32> to vector<16x16x128xf32>
    %30 = arith.truncf %29 : vector<16x16x128xf32> to vector<16x16x128xbf16>
    %c0_18 = arith.constant 0 : index
    %c0_19 = arith.constant 0 : index
    %c0_20 = arith.constant 0 : index
    %c0_21 = arith.constant 0 : index
    %c0_22 = arith.constant 0 : index
    %31 = vector.load %arg6[%c0_18, %c0_19, %c0_20, %c0_21, %c0_22] : memref<1x16x1x16x128xbf16, #tpu.memory_space<vmem>>, vector<1x16x1x16x128xbf16>
    %32 = vector.shape_cast %31 : vector<1x16x1x16x128xbf16> to vector<16x16x128xbf16>
    %33 = vector.shape_cast %30 : vector<16x16x128xbf16> to vector<1x16x1x16x128xbf16>
    tpu.vector_store %arg6[%c0_18, %c0_19, %c0_20, %c0_21, %c0_22], %33 {strides = array<i32>} : memref<1x16x1x16x128xbf16, #tpu.memory_space<vmem>>, vector<1x16x1x16x128xbf16>,
    %cst_23 = arith.constant dense<0.000000e+00> : vector<128xf32>
    %34 = vector.multi_reduction <add>, %28, %cst_23 [0] : vector<256x128xf32> to vector<128xf32>
    %35 = vector.shape_cast %34 : vector<128xf32> to vector<1x128xf32>
    %c0_24 = arith.constant 0 : index
    %c0_25 = arith.constant 0 : index
    %c0_26 = arith.constant 0 : index
    %c0_27 = arith.constant 0 : index
    %c0_28 = arith.constant 0 : index
    %c0_29 = arith.constant 0 : index
    %36 = vector.load %arg7[%c0_24, %c0_25, %c0_26, %c0_27, %c0_28, %c0_29] : memref<1x1x1x1x2x128xf32, #tpu.memory_space<vmem>>, vector<1x1x1x1x1x128xf32>
    %37 = vector.shape_cast %36 : vector<1x1x1x1x1x128xf32> to vector<1x128xf32>
    %38 = vector.shape_cast %35 : vector<1x128xf32> to vector<1x1x1x1x1x128xf32>
    tpu.vector_store %arg7[%c0_24, %c0_25, %c0_26, %c0_27, %c0_28, %c0_29], %38 {strides = array<i32>} : memref<1x1x1x1x2x128xf32, #tpu.memory_space<vmem>>, vector<1x1x1x1x1x128xf32>,
    %39 = arith.mulf %28, %28 : vector<256x128xf32>
    %cst_30 = arith.constant dense<0.000000e+00> : vector<128xf32>
    %40 = vector.multi_reduction <add>, %39, %cst_30 [0] : vector<256x128xf32> to vector<128xf32>
    %41 = vector.shape_cast %40 : vector<128xf32> to vector<1x128xf32>
    %c0_31 = arith.constant 0 : index
    %c0_32 = arith.constant 0 : index
    %c0_33 = arith.constant 0 : index
    %c0_34 = arith.constant 0 : index
    %c1 = arith.constant 1 : index
    %c0_35 = arith.constant 0 : index
    %42 = vector.load %arg7[%c0_31, %c0_32, %c0_33, %c0_34, %c1, %c0_35] : memref<1x1x1x1x2x128xf32, #tpu.memory_space<vmem>>, vector<1x1x1x1x1x128xf32>
    %43 = vector.shape_cast %42 : vector<1x1x1x1x1x128xf32> to vector<1x128xf32>
    %44 = vector.shape_cast %41 : vector<1x128xf32> to vector<1x1x1x1x1x128xf32>
    tpu.vector_store %arg7[%c0_31, %c0_32, %c0_33, %c0_34, %c1, %c0_35], %44 {strides = array<i32>} : memref<1x1x1x1x2x128xf32, #tpu.memory_space<vmem>>, vector<1x1x1x1x1x128xf32>,
    return
  }
  func.func @transform_0(%arg0: i32, %arg1: i32, %arg2: i32, %arg3: i32) -> (i32, i32, i32, i32) {
    %c0_i32 = arith.constant 0 : i32
    %c0_i32_0 = arith.constant 0 : i32
    %c0_i32_1 = arith.constant 0 : i32
    return %arg0, %arg1, %c0_i32, %c0_i32_0 : i32, i32, i32, i32
  }
  func.func @transform_1(%arg0: i32, %arg1: i32, %arg2: i32, %arg3: i32) -> (i32, i32, i32, i32) {
    %c0_i32 = arith.constant 0 : i32
    %c0_i32_0 = arith.constant 0 : i32
    %c0_i32_1 = arith.constant 0 : i32
    %c0_i32_2 = arith.constant 0 : i32
    return %arg0, %c0_i32, %c0_i32_0, %c0_i32_1 : i32, i32, i32, i32
  }
  func.func @transform_2(%arg0: i32, %arg1: i32, %arg2: i32, %arg3: i32) -> (i32, i32, i32, i32, i32) {
    %c0_i32 = arith.constant 0 : i32
    %c0_i32_0 = arith.constant 0 : i32
    return %arg1, %arg3, %arg2, %c0_i32, %arg0 : i32, i32, i32, i32, i32
  }
  func.func @transform_3(%arg0: i32, %arg1: i32, %arg2: i32, %arg3: i32) -> (i32, i32, i32, i32, i32, i32) {
    %c0_i32 = arith.constant 0 : i32
    %c0_i32_0 = arith.constant 0 : i32
    %c0_i32_1 = arith.constant 0 : i32
    return %arg0, %arg2, %arg1, %arg3, %c0_i32, %c0_i32_0 : i32, i32, i32, i32, i32, i32
  }
}

module attributes {stable_mosaic.version = 11 : i64} {
  func.func @_affine_relu_kernel(%arg0: i32, %arg1: i32, %arg2: memref<1x16x2x16x256xbf16, #tpu.memory_space<vmem>>, %arg3: memref<1x2x256xf32, #tpu.memory_space<vmem>>, %arg4: memref<1x16x2x16x256xbf16, #tpu.memory_space<vmem>>) attributes {dimension_semantics = [#tpu.dimension_semantics<parallel>, #tpu.dimension_semantics<parallel>], iteration_bounds = array<i64: 2, 1>, scalar_prefetch = 0 : i64, scratch_operands = 0 : i64, tpu.core_type = #tpu.core_type<tc>, window_params = [{transform_indices = @transform_0, window_bounds = array<i64: 1, 16, 2, 16, 256>}, {transform_indices = @transform_1, window_bounds = array<i64: 1, 2, 256>}, {transform_indices = @transform_2, window_bounds = array<i64: 1, 16, 2, 16, 256>}]} {
    %c0 = arith.constant 0 : index
    %c0_0 = arith.constant 0 : index
    %c0_1 = arith.constant 0 : index
    %c0_2 = arith.constant 0 : index
    %c0_3 = arith.constant 0 : index
    %0 = vector.load %arg2[%c0, %c0_0, %c0_1, %c0_2, %c0_3] : memref<1x16x2x16x256xbf16, #tpu.memory_space<vmem>>, vector<1x16x2x16x256xbf16>
    %1 = vector.shape_cast %0 : vector<1x16x2x16x256xbf16> to vector<16x2x16x256xbf16>
    %2 = arith.extf %1 : vector<16x2x16x256xbf16> to vector<16x2x16x256xf32>
    %c0_4 = arith.constant 0 : index
    %c0_5 = arith.constant 0 : index
    %c0_6 = arith.constant 0 : index
    %3 = vector.load %arg3[%c0_4, %c0_5, %c0_6] : memref<1x2x256xf32, #tpu.memory_space<vmem>>, vector<1x1x256xf32>
    %4 = vector.shape_cast %3 : vector<1x1x256xf32> to vector<256xf32>
    %5 = vector.shape_cast %4 : vector<256xf32> to vector<1x1x1x256xf32>
    %6 = vector.broadcast %5 : vector<1x1x1x256xf32> to vector<16x2x16x256xf32>
    %7 = arith.mulf %2, %6 : vector<16x2x16x256xf32>
    %c0_7 = arith.constant 0 : index
    %c1 = arith.constant 1 : index
    %c0_8 = arith.constant 0 : index
    %8 = vector.load %arg3[%c0_7, %c1, %c0_8] : memref<1x2x256xf32, #tpu.memory_space<vmem>>, vector<1x1x256xf32>
    %9 = vector.shape_cast %8 : vector<1x1x256xf32> to vector<256xf32>
    %10 = vector.shape_cast %9 : vector<256xf32> to vector<1x1x1x256xf32>
    %11 = vector.broadcast %10 : vector<1x1x1x256xf32> to vector<16x2x16x256xf32>
    %12 = arith.addf %7, %11 : vector<16x2x16x256xf32>
    %cst = arith.constant 0.000000e+00 : f32
    %13 = vector.broadcast %cst : f32 to vector<16x2x16x256xf32>
    %14 = arith.maximumf %12, %13 : vector<16x2x16x256xf32>
    %15 = arith.truncf %14 : vector<16x2x16x256xf32> to vector<16x2x16x256xbf16>
    %c0_9 = arith.constant 0 : index
    %c0_10 = arith.constant 0 : index
    %c0_11 = arith.constant 0 : index
    %c0_12 = arith.constant 0 : index
    %c0_13 = arith.constant 0 : index
    %16 = vector.load %arg4[%c0_9, %c0_10, %c0_11, %c0_12, %c0_13] : memref<1x16x2x16x256xbf16, #tpu.memory_space<vmem>>, vector<1x16x2x16x256xbf16>
    %17 = vector.shape_cast %16 : vector<1x16x2x16x256xbf16> to vector<16x2x16x256xbf16>
    %18 = vector.shape_cast %15 : vector<16x2x16x256xbf16> to vector<1x16x2x16x256xbf16>
    tpu.vector_store %arg4[%c0_9, %c0_10, %c0_11, %c0_12, %c0_13], %18 {strides = array<i32>} : memref<1x16x2x16x256xbf16, #tpu.memory_space<vmem>>, vector<1x16x2x16x256xbf16>,
    return
  }
  func.func @transform_0(%arg0: i32, %arg1: i32) -> (i32, i32, i32, i32, i32) {
    %c0_i32 = arith.constant 0 : i32
    %c0_i32_0 = arith.constant 0 : i32
    %c0_i32_1 = arith.constant 0 : i32
    %c0_i32_2 = arith.constant 0 : i32
    return %arg0, %arg1, %c0_i32, %c0_i32_0, %c0_i32_1 : i32, i32, i32, i32, i32
  }
  func.func @transform_1(%arg0: i32, %arg1: i32) -> (i32, i32, i32) {
    %c0_i32 = arith.constant 0 : i32
    %c0_i32_0 = arith.constant 0 : i32
    %c0_i32_1 = arith.constant 0 : i32
    return %arg0, %c0_i32, %c0_i32_0 : i32, i32, i32
  }
  func.func @transform_2(%arg0: i32, %arg1: i32) -> (i32, i32, i32, i32, i32) {
    %c0_i32 = arith.constant 0 : i32
    %c0_i32_0 = arith.constant 0 : i32
    %c0_i32_1 = arith.constant 0 : i32
    %c0_i32_2 = arith.constant 0 : i32
    return %arg0, %arg1, %c0_i32, %c0_i32_0, %c0_i32_1 : i32, i32, i32, i32, i32
  }
}

</mosaic_0001>

<llo_original>
// kernel: decoder_block_forward.2
$region0: #{decoder_block_forward.2}
  #allocation0 [shape = 'u32[]', space=smem, size = 0x4, offset = 0x4, fixed_abs, tag = 'smem constant byte address 0x4 - core index']
  #allocation1 [shape = 'u32[144,128]{1,0:T(1,128)}', space=vmem, size = 0x12000, scoped, tag = 'internal scratch']
  %s0 = inlined_call_operand.vmem [shape: bf16[2,2,288,8], index: 0, kind: input, shape index: {}]
  %s1 = inlined_call_operand.vmem [shape: bf16[2,4,8,128], index: 1, kind: input, shape index: {}]
  %s2 = inlined_call_operand.vmem [shape: bf16[2,16,2,16,256], index: 2, kind: output, shape index: {0}]
  %s3 = inlined_call_operand.vmem [shape: f32[2,2,2,1,2,128], index: 3, kind: output, shape index: {1}]
  %4 = xla_tuple %s2, %s3
  %s5 = sld [smem:[#allocation0]]
  $region86: #{decoder_block_forward.2} parent=0
    _
  %s7 = ssub.s32 1, %s5
  %s8 = scalar_select 0, %s7, %s5
  $region1: #{decoder_block_forward.2} parent=0
    #allocation2 [shape = 'u8[131072]{0}', space=vmem, size = 0x20000, scoped, tag = 'output window, operand 0']
    loop: start=0, step=1, limit=10
    $region2: #{decoder_block_forward.2} parent=1 // loop_pre_header
      _
    $region3: #{decoder_block_forward.2} parent=1 // loop_header
      %s10 = sphi 0, %s14
      %p11 = scmp.ge.s32.totalorder %s10, 10
      %s17 = sphi 0, %s43
      %s18 = sphi 0, %s39
      %s19 = sphi 0, %s35
      %s20 = sphi 0, %s31
      %s21 = sphi 0, %s17
      %s22 = sphi 0, %s18
      %s23 = sphi 0, %s19
      %s24 = sphi 0, %s20
      %s25 = sphi 0, %s21
      %s26 = sphi 0, %s22
      %s27 = sphi 0, %s23
      %s28 = sphi 0, %s24
      %s48 = sphi 0, %s50
      %s51 = sphi 0, %s48
      %s52 = sphi 0, %s51
      %s68 = sphi 0, %s52
      %s74 = sphi 0, %s76
      %s77 = sphi 0, %s74
      %s78 = sphi 0, %s77
      %s94 = sphi 0, %s78
      %s106 = sphi 0, %s108
      %s109 = sphi 0, %s106
      %s110 = sphi 0, %s109
      %s126 = sphi 0, %s110
      %s138 = sphi 0, %s140
      %s141 = sphi 0, %s138
      %s142 = sphi 0, %s141
      %s158 = sphi 0, %s142
    $region4: #{decoder_block_forward.2} parent=1 // loop_header_branch
      %13 = sbr.rel (%p11) target = $region8
    $region5: #{decoder_block_forward.2} parent=1 // loop_body
      %s15 = ssub.s32 %s10, 1
      %s16 = ssub.s32 %s10, 2
      %s29 = sadd.s32 1, %s20
      %p30 = scmp.ge.s32.totalorder %s29, 1
      %s31 = scalar_select %p30, 0, %s29
      %s32 = sadd.s32 1, %s19
      %s33 = scalar_select %p30, %s32, %s19
      %p34 = scmp.ge.s32.totalorder %s33, 2
      %s35 = scalar_select %p34, 0, %s33
      %s36 = sadd.s32 1, %s18
      %s37 = scalar_select %p34, %s36, %s18
      %p38 = scmp.ge.s32.totalorder %s37, 2
      %s39 = scalar_select %p38, 0, %s37
      %s40 = sadd.s32 1, %s17
      %s41 = scalar_select %p38, %s40, %s17
      %p42 = scmp.ge.s32.totalorder %s41, 2
      %s43 = scalar_select %p42, 0, %s41
      %s44 = ssub.s32 %s17, %s43
      %s45 = ssub.s32 %s18, %s39
      %s46 = sor.u32 %s44, %s45
      %p47 = scmp.eq.s32.totalorder %s46, 0
      %s49 = sadd.s32 %s48, 1
      %s50 = scalar_select %p47, %s48, %s49
      %p53 = pneg %p47
      %p54 = scmp.eq.s32.totalorder %s10, 7
      %p55 = por %p53, %p54
      %p56 = scmp.ne.s32.totalorder %s48, %s51
      %p57 = scmp.eq.s32.totalorder %s10, 0
      %p58 = por %p56, %p57
      %p59 = scmp.ne.s32.totalorder %s48, %s51
      %p60 = scmp.eq.s32.totalorder %s15, 7
      %p61 = por %p59, %p60
      %p62 = scmp.ne.s32.totalorder %s51, %s52
      %p63 = scmp.eq.s32.totalorder %s15, 0
      %p64 = por %p62, %p63
      %p65 = scmp.ne.s32.totalorder %s51, %s52
      %p66 = scmp.eq.s32.totalorder %s16, 7
      %p67 = por %p65, %p66
      %p69 = scmp.ne.s32.totalorder %s52, %s68
      %p70 = scmp.eq.s32.totalorder %s16, 0
      %p71 = por %p69, %p70
      %s72 = ssub.s32 %s17, %s43
      %p73 = scmp.eq.s32.totalorder %s72, 0
      %s75 = sadd.s32 %s74, 1
      %s76 = scalar_select %p73, %s74, %s75
      %p79 = pneg %p73
      %p80 = scmp.eq.s32.totalorder %s10, 7
      %p81 = por %p79, %p80
      %p82 = scmp.ne.s32.totalorder %s74, %s77
      %p83 = scmp.eq.s32.totalorder %s10, 0
      %p84 = por %p82, %p83
      %p85 = scmp.ne.s32.totalorder %s74, %s77
      %p86 = scmp.eq.s32.totalorder %s15, 7
      %p87 = por %p85, %p86
      %p88 = scmp.ne.s32.totalorder %s77, %s78
      %p89 = scmp.eq.s32.totalorder %s15, 0
      %p90 = por %p88, %p89
      %p91 = scmp.ne.s32.totalorder %s77, %s78
      %p92 = scmp.eq.s32.totalorder %s16, 7
      %p93 = por %p91, %p92
      %p95 = scmp.ne.s32.totalorder %s78, %s94
      %p96 = scmp.eq.s32.totalorder %s16, 0
      %p97 = por %p95, %p96
      %s98 = ssub.s32 %s18, %s39
      %s99 = ssub.s32 %s20, %s31
      %s100 = sor.u32 %s98, %s99
      %s101 = ssub.s32 %s19, %s35
      %s102 = sor.u32 %s100, %s101
      %s103 = ssub.s32 %s17, %s43
      %s104 = sor.u32 %s102, %s103
      %p105 = scmp.eq.s32.totalorder %s104, 0
      %s107 = sadd.s32 %s106, 1
      %s108 = scalar_select %p105, %s106, %s107
      %p111 = pneg %p105
      %p112 = scmp.eq.s32.totalorder %s10, 7
      %p113 = por %p111, %p112
      %p114 = scmp.ne.s32.totalorder %s106, %s109
      %p115 = scmp.eq.s32.totalorder %s10, 0
      %p116 = por %p114, %p115
      %p117 = scmp.ne.s32.totalorder %s106, %s109
      %p118 = scmp.eq.s32.totalorder %s15, 7
      %p119 = por %p117, %p118
      %p120 = scmp.ne.s32.totalorder %s109, %s110
      %p121 = scmp.eq.s32.totalorder %s15, 0
      %p122 = por %p120, %p121
      %p123 = scmp.ne.s32.totalorder %s109, %s110
      %p124 = scmp.eq.s32.totalorder %s16, 7
      %p125 = por %p123, %p124
      %p127 = scmp.ne.s32.totalorder %s110, %s126
      %p128 = scmp.eq.s32.totalorder %s16, 0
      %p129 = por %p127, %p128
      %s130 = ssub.s32 %s17, %s43
      %s131 = ssub.s32 %s19, %s35
      %s132 = sor.u32 %s130, %s131
      %s133 = ssub.s32 %s18, %s39
      %s134 = sor.u32 %s132, %s133
      %s135 = ssub.s32 %s20, %s31
      %s136 = sor.u32 %s134, %s135
      %p137 = scmp.eq.s32.totalorder %s136, 0
      %s139 = sadd.s32 %s138, 1
      %s140 = scalar_select %p137, %s138, %s139
      %p143 = pneg %p137
      %p144 = scmp.eq.s32.totalorder %s10, 7
      %p145 = por %p143, %p144
      %p146 = scmp.ne.s32.totalorder %s138, %s141
      %p147 = scmp.eq.s32.totalorder %s10, 0
      %p148 = por %p146, %p147
      %p149 = scmp.ne.s32.totalorder %s138, %s141
      %p150 = scmp.eq.s32.totalorder %s15, 7
      %p151 = por %p149, %p150
      %p152 = scmp.ne.s32.totalorder %s141, %s142
      %p153 = scmp.eq.s32.totalorder %s15, 0
      %p154 = por %p152, %p153
      %p155 = scmp.ne.s32.totalorder %s141, %s142
      %p156 = scmp.eq.s32.totalorder %s16, 7
      %p157 = por %p155, %p156
      %p159 = scmp.ne.s32.totalorder %s142, %s158
      %p160 = scmp.eq.s32.totalorder %s16, 0
      %p161 = por %p159, %p160
      %p162 = scmp.le.s32.totalorder 1, %s10
      %p163 = scmp.lt.s32.totalorder %s10, 9
      %p164 = pnand %p162, %p163
      %p165 = pneg %p164
      // Predicated region
      $region9: #{decoder_block_forward.2} parent=5 // pred_check
        _
      $region10: #{decoder_block_forward.2} parent=5 // pred_check_branch
        %167 = sbr.rel (%p164) target = $region12
      $region11: #{decoder_block_forward.2} parent=5 // pred_region
        %s168 = ssub.s32 %s10, 1
      $region12: #{decoder_block_forward.2} parent=5 // pred_fallthru
        _
      %p169 = scmp.lt.s32.totalorder %s10, 8
      // Predicated region
      $region13: #{decoder_block_forward.2} parent=5 // pred_check
        %p170 = pneg %p169
      $region14: #{decoder_block_forward.2} parent=5 // pred_check_branch
        %172 = sbr.rel (%p170) target = $region16
      $region15: #{decoder_block_forward.2} parent=5 // pred_region
        // Predicated region
        $region17: #{decoder_block_forward.2} parent=15 // pred_check
          %p173 = pneg %p58
        $region18: #{decoder_block_forward.2} parent=15 // pred_check_branch
          %175 = sbr.rel (%p173) target = $region20
        $region19: #{decoder_block_forward.2} parent=15 // pred_region
          %p176 = scmp.lt.s32.totalorder %s17, 1
          %s177 = scalar_select %p176, %s17, 1
          %p178 = scmp.lt.s32.totalorder %s18, 1
          %s179 = scalar_select %p178, %s18, 1
          %s180 = smul.addr %s179, 36
          %s181 = smul.addr %s177, 72
          %s182 = sadd.s32 %s180, %s181
          %s183 = smul.addr %s182, 4
          %s184 = scalar_lea.vmem %s0, %s183
        $region20: #{decoder_block_forward.2} parent=15 // pred_fallthru
          _
        // Predicated region
        $region21: #{decoder_block_forward.2} parent=15 // pred_check
          %p185 = pneg %p84
        $region22: #{decoder_block_forward.2} parent=15 // pred_check_branch
          %187 = sbr.rel (%p185) target = $region24
        $region23: #{decoder_block_forward.2} parent=15 // pred_region
          %p188 = scmp.lt.s32.totalorder %s17, 1
          %s189 = scalar_select %p188, %s17, 1
          %s190 = smul.addr %s189, 4
          %s191 = smul.addr %s190, 4
          %s192 = scalar_lea.vmem %s1, %s191
        $region24: #{decoder_block_forward.2} parent=15 // pred_fallthru
          _
      $region16: #{decoder_block_forward.2} parent=5 // pred_fallthru
        _
      %p193 = scmp.le.s32.totalorder 1, %s10
      %p194 = scmp.lt.s32.totalorder %s10, 9
      %p195 = pnand %p193, %p194
      %p196 = pneg %p195
      // Predicated region
      $region25: #{decoder_block_forward.2} parent=5 // pred_check
        _
      $region26: #{decoder_block_forward.2} parent=5 // pred_check_branch
        %198 = sbr.rel (%p195) target = $region28
      $region27: #{decoder_block_forward.2} parent=5 // pred_region
        %s199 = ssub.s32 %s10, 1
        %p200 = scmp.lt.s32.totalorder %s21, 1
        %s201 = scalar_select %p200, %s21, 1
        %p202 = scmp.lt.s32.totalorder %s22, 1
        %s203 = scalar_select %p202, %s22, 1
        %s204 = smul.addr %s203, 36
        %s205 = smul.addr %s201, 72
        %s206 = sadd.s32 %s204, %s205
        %s207 = smul.addr %s206, 4
        %s208 = scalar_lea.vmem %s0, %s207
        %p209 = pneg %p64
        %p210 = pneg %p61
        %p211 = scmp.lt.s32.totalorder %s21, 1
        %s212 = scalar_select %p211, %s21, 1
        %s213 = smul.addr %s212, 4
        %s214 = smul.addr %s213, 4
        %s215 = scalar_lea.vmem %s1, %s214
        %p216 = pneg %p90
        %p217 = pneg %p87
        %p218 = pneg %p122
        %p219 = pneg %p119
        %s220 = sand.u32 %s109, 1
        %s221 = sand.u32 %s109, 1
        %s222 = smul.addr %s221, 128
        %s223 = scalar_lea.vmem [#allocation2], %s222
        %p224 = pneg %p154
        %p225 = pneg %p151
        %p226 = scmp.lt.s32.totalorder %s21, 1
        %s227 = scalar_select %p226, %s21, 1
        %p228 = scmp.lt.s32.totalorder %s23, 1
        %s229 = scalar_select %p228, %s23, 1
        %p230 = scmp.lt.s32.totalorder %s22, 1
        %s231 = scalar_select %p230, %s22, 1
        %p232 = scmp.lt.s32.totalorder %s24, 0
        %s233 = scalar_select %p232, %s24, 0
        %s234 = sadd.s32 %s233, %s231
        %s235 = smul.addr %s229, 2
        %s236 = sadd.s32 %s234, %s235
        %s237 = smul.addr %s227, 4
        %s238 = sadd.s32 %s236, %s237
        %s239 = smul.addr %s238, 2
        %s240 = scalar_lea.vmem %s3, %s239
        %p241 = scmp.lt.s32.totalorder %s21, 1
        %s242 = scalar_select %p241, %s21, 1
        %p243 = scmp.lt.s32.totalorder %s22, 1
        %s244 = scalar_select %p243, %s22, 1
        %s245 = smul.addr %s244, 36
        %s246 = smul.addr %s242, 72
        %s247 = sadd.s32 %s245, %s246
        %s248 = smul.addr %s247, 4
        %s249 = scalar_lea.vmem %s0, %s248
        %p250 = scmp.lt.s32.totalorder %s21, 1
        %s251 = scalar_select %p250, %s21, 1
        %s252 = smul.addr %s251, 4
        %s253 = smul.addr %s252, 4
        %s254 = scalar_lea.vmem %s1, %s253
        %s255 = smul.u32 16, %s24
        %p256 = scmp.lt.s32.totalorder %s21, 1
        %s257 = scalar_select %p256, %s21, 1
        %p258 = scmp.lt.s32.totalorder %s23, 1
        %s259 = scalar_select %p258, %s23, 1
        %p260 = scmp.lt.s32.totalorder %s22, 1
        %s261 = scalar_select %p260, %s22, 1
        %p262 = scmp.lt.s32.totalorder %s24, 0
        %s263 = scalar_select %p262, %s24, 0
        %s264 = sadd.s32 %s263, %s261
        %s265 = smul.addr %s259, 2
        %s266 = sadd.s32 %s264, %s265
        %s267 = smul.addr %s257, 4
        %s268 = sadd.s32 %s266, %s267
        %s269 = smul.addr %s268, 2
        %s270 = scalar_lea.vmem %s3, %s269
        %s272 = smul.u32 %s24, 16
        %s273 = sadd.s32 %s272, %s23
        %s274 = smul.u32 %s273, 16
        %s275 = sshra.s32 %s274, 3
        %s276 = sand.u32 %s274, 7
        %s277 = smul.addr %s275, 4
        %s278 = scalar_lea.vmem %s249, %s277
        %v279 = vld [vmem:[%s278] sm:$0xf]
        %v280 = vld [vmem:[%s278 + $0x4] sm:$0xf]
        %v281 = vld [vmem:[%s278 + $0x8] sm:$0xf]
        %v282 = vld [vmem:[%s278 + $0xc] sm:$0xf]
        %v283 = vld [vmem:[%s278 + $0x10] sm:$0xf]
        %v284 = vld [vmem:[%s278 + $0x14] sm:$0xf]
        %v285 = vld [vmem:[%s278 + $0x18] sm:$0xf]
        %v286 = vld [vmem:[%s278 + $0x1c] sm:$0xf]
        %v287 = vld [vmem:[%s278 + $0x20] sm:$0xf]
        %v288 = vld [vmem:[%s278 + $0x24] sm:$0xf]
        %v289 = vld [vmem:[%s278 + $0x28] sm:$0xf]
        %v290 = vld [vmem:[%s278 + $0x2c] sm:$0xf]
        %v291 = vld [vmem:[%s278 + $0x30] sm:$0xf]
        %v292 = vld [vmem:[%s278 + $0x34] sm:$0xf]
        %v293 = vld [vmem:[%s278 + $0x38] sm:$0xf]
        %v294 = vld [vmem:[%s278 + $0x3c] sm:$0xf]
        %v295 = vld [vmem:[%s278 + $0x40] sm:$0xf]
        %v296 = vld [vmem:[%s278 + $0x44] sm:$0xf]
        %v297 = vld [vmem:[%s278 + $0x48] sm:$0xf]
        %v298 = vld [vmem:[%s278 + $0x4c] sm:$0xf]
        %v299 = vld [vmem:[%s278 + $0x50] sm:$0xf]
        %v300 = vld [vmem:[%s278 + $0x54] sm:$0xf]
        %v301 = vld [vmem:[%s278 + $0x58] sm:$0xf]
        %v302 = vld [vmem:[%s278 + $0x5c] sm:$0xf]
        %v303 = vld [vmem:[%s278 + $0x60] sm:$0xf]
        %v304 = vld [vmem:[%s278 + $0x64] sm:$0xf]
        %v305 = vld [vmem:[%s278 + $0x68] sm:$0xf]
        %v306 = vld [vmem:[%s278 + $0x6c] sm:$0xf]
        %v307 = vld [vmem:[%s278 + $0x70] sm:$0xf]
        %v308 = vld [vmem:[%s278 + $0x74] sm:$0xf]
        %v309 = vld [vmem:[%s278 + $0x78] sm:$0xf]
        %v310 = vld [vmem:[%s278 + $0x7c] sm:$0xf]
        %s311 = smul.u32 %s23, 2
        %s312 = smul.addr %s311, 4
        %s313 = scalar_lea.vmem %s254, %s312
        %v314 = vld [vmem:[%s313] sm:$0xf]
        %s315 = sadd.s32 %s273, 1
        %s316 = smul.u32 %s315, 16
        %s317 = sshra.s32 %s316, 3
        %s318 = sand.u32 %s316, 7
        %s319 = smul.addr %s317, 4
        %s320 = scalar_lea.vmem %s249, %s319
        %v321 = vld [vmem:[%s320] sm:$0xf]
        %v322 = vld [vmem:[%s320 + $0x4] sm:$0xf]
        %v323 = vld [vmem:[%s320 + $0x8] sm:$0xf]
        %v324 = vld [vmem:[%s320 + $0xc] sm:$0xf]
        %v325 = vld [vmem:[%s320 + $0x10] sm:$0xf]
        %v326 = vld [vmem:[%s320 + $0x14] sm:$0xf]
        %v327 = vld [vmem:[%s320 + $0x18] sm:$0xf]
        %v328 = vld [vmem:[%s320 + $0x1c] sm:$0xf]
        %v329 = vld [vmem:[%s320 + $0x20] sm:$0xf]
        %v330 = vld [vmem:[%s320 + $0x24] sm:$0xf]
        %v331 = vld [vmem:[%s320 + $0x28] sm:$0xf]
        %v332 = vld [vmem:[%s320 + $0x2c] sm:$0xf]
        %v333 = vld [vmem:[%s320 + $0x30] sm:$0xf]
        %v334 = vld [vmem:[%s320 + $0x34] sm:$0xf]
        %v335 = vld [vmem:[%s320 + $0x38] sm:$0xf]
        %v336 = vld [vmem:[%s320 + $0x3c] sm:$0xf]
        %v337 = vld [vmem:[%s320 + $0x40] sm:$0xf]
        %v338 = vld [vmem:[%s320 + $0x44] sm:$0xf]
        %v339 = vld [vmem:[%s320 + $0x48] sm:$0xf]
        %v340 = vld [vmem:[%s320 + $0x4c] sm:$0xf]
        %v341 = vld [vmem:[%s320 + $0x50] sm:$0xf]
        %v342 = vld [vmem:[%s320 + $0x54] sm:$0xf]
        %v343 = vld [vmem:[%s320 + $0x58] sm:$0xf]
        %v344 = vld [vmem:[%s320 + $0x5c] sm:$0xf]
        %v345 = vld [vmem:[%s320 + $0x60] sm:$0xf]
        %v346 = vld [vmem:[%s320 + $0x64] sm:$0xf]
        %v347 = vld [vmem:[%s320 + $0x68] sm:$0xf]
        %v348 = vld [vmem:[%s320 + $0x6c] sm:$0xf]
        %v349 = vld [vmem:[%s320 + $0x70] sm:$0xf]
        %v350 = vld [vmem:[%s320 + $0x74] sm:$0xf]
        %v351 = vld [vmem:[%s320 + $0x78] sm:$0xf]
        %v352 = vld [vmem:[%s320 + $0x7c] sm:$0xf]
        %s353 = sadd.s32 %s311, 1
        %s354 = smul.addr %s353, 4
        %s355 = scalar_lea.vmem %s254, %s354
        %v356 = vld [vmem:[%s355] sm:$0xf]
        %v389 = vunpack.c.l.b16 %v321
        %v390 = vunpack.c.l.b16 %v322
        %v391 = vunpack.c.l.b16 %v323
        %v392 = vunpack.c.l.b16 %v324
        %v393 = vunpack.c.l.b16 %v325
        %v394 = vunpack.c.l.b16 %v326
        %v395 = vunpack.c.l.b16 %v327
        %v396 = vunpack.c.l.b16 %v328
        %v397 = vunpack.c.l.b16 %v329
        %v398 = vunpack.c.l.b16 %v330
        %v399 = vunpack.c.l.b16 %v331
        %v400 = vunpack.c.l.b16 %v332
        %v401 = vunpack.c.l.b16 %v333
        %v402 = vunpack.c.l.b16 %v334
        %v403 = vunpack.c.l.b16 %v335
        %v404 = vunpack.c.l.b16 %v336
        %v405 = vunpack.c.l.b16 %v337
        %v406 = vunpack.c.l.b16 %v338
        %v407 = vunpack.c.l.b16 %v339
        %v408 = vunpack.c.l.b16 %v340
        %v409 = vunpack.c.l.b16 %v341
        %v410 = vunpack.c.l.b16 %v342
        %v411 = vunpack.c.l.b16 %v343
        %v412 = vunpack.c.l.b16 %v344
        %v413 = vunpack.c.l.b16 %v345
        %v414 = vunpack.c.l.b16 %v346
        %v415 = vunpack.c.l.b16 %v347
        %v416 = vunpack.c.l.b16 %v348
        %v417 = vunpack.c.l.b16 %v349
        %v418 = vunpack.c.l.b16 %v350
        %v419 = vunpack.c.l.b16 %v351
        %v420 = vunpack.c.l.b16 %v352
        %v421 = vpack.c.b16 %v390, %v389
        %v422 = vpack.c.b16 %v392, %v391
        %v423 = vpack.c.b16 %v394, %v393
        %v424 = vpack.c.b16 %v396, %v395
        %v425 = vpack.c.b16 %v398, %v397
        %v426 = vpack.c.b16 %v400, %v399
        %v427 = vpack.c.b16 %v402, %v401
        %v428 = vpack.c.b16 %v404, %v403
        %v429 = vpack.c.b16 %v406, %v405
        %v430 = vpack.c.b16 %v408, %v407
        %v431 = vpack.c.b16 %v410, %v409
        %v432 = vpack.c.b16 %v412, %v411
        %v433 = vpack.c.b16 %v414, %v413
        %v434 = vpack.c.b16 %v416, %v415
        %v435 = vpack.c.b16 %v418, %v417
        %v436 = vpack.c.b16 %v420, %v419
        %vm437 = vcmask 64512
        %v439 = vsel %vm437, %v421, 0
        %v442 = vsel %vm437, %v422, 0
        %v445 = vsel %vm437, %v423, 0
        %v448 = vsel %vm437, %v424, 0
        %v451 = vsel %vm437, %v425, 0
        %v454 = vsel %vm437, %v426, 0
        %v457 = vsel %vm437, %v427, 0
        %v460 = vsel %vm437, %v428, 0
        %v463 = vsel %vm437, %v429, 0
        %v466 = vsel %vm437, %v430, 0
        %v469 = vsel %vm437, %v431, 0
        %v472 = vsel %vm437, %v432, 0
        %v475 = vsel %vm437, %v433, 0
        %v478 = vsel %vm437, %v434, 0
        %v481 = vsel %vm437, %v435, 0
        %v484 = vsel %vm437, %v436, 0
        %vm486 = vcmask 1043456
        %v488 = vsel %vm486, %v356, 0
        %490 = vmatprep.subr.bf16.mxu0 0
        %491 = vmatpush1.bf16.msra.mxu0 %v488
        %492 = vmatprep.subr.bf16.mxu0 0
        %493 = vmatpush1.bf16.msra.mxu0 0
        %494 = vmatprep.subr.bf16.mxu0 0
        %495 = vmatpush1.bf16.msra.mxu0 0
        %496 = vmatprep.subr.bf16.mxu0 0
        %497 = vmatpush1.bf16.msra.mxu0 0
        %498 = vmatprep.subr.bf16.mxu0 0
        %499 = vmatpush1.bf16.msra.mxu0 0
        %500 = vmatprep.subr.bf16.mxu0 0
        %501 = vmatpush1.bf16.msra.mxu0 0
        %502 = vmatprep.subr.bf16.mxu0 0
        %503 = vmatpush1.bf16.msra.mxu0 0
        %504 = vmatprep.subr.bf16.mxu0 0
        %505 = vmatpush1.bf16.msra.mxu0 0
        %506 = vmatprep.subr.bf16.mxu0 0
        %507 = vmatpush1.bf16.msra.mxu0 0
        %508 = vmatprep.subr.bf16.mxu0 0
        %509 = vmatpush1.bf16.msra.mxu0 0
        %510 = vmatprep.subr.bf16.mxu0 0
        %511 = vmatpush1.bf16.msra.mxu0 0
        %512 = vmatprep.subr.bf16.mxu0 0
        %513 = vmatpush1.bf16.msra.mxu0 0
        %514 = vmatprep.subr.bf16.mxu0 0
        %515 = vmatpush1.bf16.msra.mxu0 0
        %516 = vmatprep.subr.bf16.mxu0 0
        %517 = vmatpush1.bf16.msra.mxu0 0
        %518 = vmatprep.subr.bf16.mxu0 0
        %519 = vmatpush1.bf16.msra.mxu0 0
        %520 = vmatprep.subr.bf16.mxu0 0
        %521 = vmatpush1.bf16.msra.mxu0 0
        %522 = vmatprep.mubr.bf16.mxu0 0
        %523 = vmatmul.mubr.bf16.gmra.mrb[0].mxu0 %v439
        %v524 = vpop.f32.mrb[0].mxu0
        %v525 = vadd.f32 0.0, %v524
        %v526 = vpop.f32.mrb[0].mxu0
        %v527 = vpop.f32.mrb[0].mxu0
        %v528 = vadd.f32 0.0, %v527
        %v529 = vpop.f32.mrb[0].mxu0
        %530 = vmatprep.mubr.bf16.mxu0 0
        %531 = vmatmul.mubr.bf16.gmra.mrb[0].mxu0 %v442
        %v532 = vpop.f32.mrb[0].mxu0
        %v533 = vadd.f32 0.0, %v532
        %v534 = vpop.f32.mrb[0].mxu0
        %v535 = vpop.f32.mrb[0].mxu0
        %v536 = vadd.f32 0.0, %v535
        %v537 = vpop.f32.mrb[0].mxu0
        %538 = vmatprep.mubr.bf16.mxu0 0
        %539 = vmatmul.mubr.bf16.gmra.mrb[0].mxu0 %v445
        %v540 = vpop.f32.mrb[0].mxu0
        %v541 = vadd.f32 0.0, %v540
        %v542 = vpop.f32.mrb[0].mxu0
        %v543 = vpop.f32.mrb[0].mxu0
        %v544 = vadd.f32 0.0, %v543
        %v545 = vpop.f32.mrb[0].mxu0
        %546 = vmatprep.mubr.bf16.mxu0 0
        %547 = vmatmul.mubr.bf16.gmra.mrb[0].mxu0 %v448
        %v548 = vpop.f32.mrb[0].mxu0
        %v549 = vadd.f32 0.0, %v548
        %v550 = vpop.f32.mrb[0].mxu0
        %v551 = vpop.f32.mrb[0].mxu0
        %v552 = vadd.f32 0.0, %v551
        %v553 = vpop.f32.mrb[0].mxu0
        %554 = vmatprep.mubr.bf16.mxu0 0
        %555 = vmatmul.mubr.bf16.gmra.mrb[0].mxu0 %v451
        %v556 = vpop.f32.mrb[0].mxu0
        %v557 = vadd.f32 0.0, %v556
        %v558 = vpop.f32.mrb[0].mxu0
        %v559 = vpop.f32.mrb[0].mxu0
        %v560 = vadd.f32 0.0, %v559
        %v561 = vpop.f32.mrb[0].mxu0
        %562 = vmatprep.mubr.bf16.mxu0 0
        %563 = vmatmul.mubr.bf16.gmra.mrb[0].mxu0 %v454
        %v564 = vpop.f32.mrb[0].mxu0
        %v565 = vadd.f32 0.0, %v564
        %v566 = vpop.f32.mrb[0].mxu0
        %v567 = vpop.f32.mrb[0].mxu0
        %v568 = vadd.f32 0.0, %v567
        %v569 = vpop.f32.mrb[0].mxu0
        %570 = vmatprep.mubr.bf16.mxu0 0
        %571 = vmatmul.mubr.bf16.gmra.mrb[0].mxu0 %v457
        %v572 = vpop.f32.mrb[0].mxu0
        %v573 = vadd.f32 0.0, %v572
        %v574 = vpop.f32.mrb[0].mxu0
        %v575 = vpop.f32.mrb[0].mxu0
        %v576 = vadd.f32 0.0, %v575
        %v577 = vpop.f32.mrb[0].mxu0
        %578 = vmatprep.mubr.bf16.mxu0 0
        %579 = vmatmul.mubr.bf16.gmra.mrb[0].mxu0 %v460
        %v580 = vpop.f32.mrb[0].mxu0
        %v581 = vadd.f32 0.0, %v580
        %v582 = vpop.f32.mrb[0].mxu0
        %v583 = vpop.f32.mrb[0].mxu0
        %v584 = vadd.f32 0.0, %v583
        %v585 = vpop.f32.mrb[0].mxu0
        %586 = vmatprep.mubr.bf16.mxu0 0
        %587 = vmatmul.mubr.bf16.gmra.mrb[0].mxu0 %v463
        %v588 = vpop.f32.mrb[0].mxu0
        %v589 = vadd.f32 0.0, %v588
        %v590 = vpop.f32.mrb[0].mxu0
        %v591 = vpop.f32.mrb[0].mxu0
        %v592 = vadd.f32 0.0, %v591
        %v593 = vpop.f32.mrb[0].mxu0
        %594 = vmatprep.mubr.bf16.mxu0 0
        %595 = vmatmul.mubr.bf16.gmra.mrb[0].mxu0 %v466
        %v596 = vpop.f32.mrb[0].mxu0
        %v597 = vadd.f32 0.0, %v596
        %v598 = vpop.f32.mrb[0].mxu0
        %v599 = vpop.f32.mrb[0].mxu0
        %v600 = vadd.f32 0.0, %v599
        %v601 = vpop.f32.mrb[0].mxu0
        %602 = vmatprep.mubr.bf16.mxu0 0
        %603 = vmatmul.mubr.bf16.gmra.mrb[0].mxu0 %v469
        %v604 = vpop.f32.mrb[0].mxu0
        %v605 = vadd.f32 0.0, %v604
        %v606 = vpop.f32.mrb[0].mxu0
        %v607 = vpop.f32.mrb[0].mxu0
        %v608 = vadd.f32 0.0, %v607
        %v609 = vpop.f32.mrb[0].mxu0
        %610 = vmatprep.mubr.bf16.mxu0 0
        %611 = vmatmul.mubr.bf16.gmra.mrb[0].mxu0 %v472
        %v612 = vpop.f32.mrb[0].mxu0
        %v613 = vadd.f32 0.0, %v612
        %v614 = vpop.f32.mrb[0].mxu0
        %v615 = vpop.f32.mrb[0].mxu0
        %v616 = vadd.f32 0.0, %v615
        %v617 = vpop.f32.mrb[0].mxu0
        %618 = vmatprep.mubr.bf16.mxu0 0
        %619 = vmatmul.mubr.bf16.gmra.mrb[0].mxu0 %v475
        %v620 = vpop.f32.mrb[0].mxu0
        %v621 = vadd.f32 0.0, %v620
        %v622 = vpop.f32.mrb[0].mxu0
        %v623 = vpop.f32.mrb[0].mxu0
        %v624 = vadd.f32 0.0, %v623
        %v625 = vpop.f32.mrb[0].mxu0
        %626 = vmatprep.mubr.bf16.mxu0 0
        %627 = vmatmul.mubr.bf16.gmra.mrb[0].mxu0 %v478
        %v628 = vpop.f32.mrb[0].mxu0
        %v629 = vadd.f32 0.0, %v628
        %v630 = vpop.f32.mrb[0].mxu0
        %v631 = vpop.f32.mrb[0].mxu0
        %v632 = vadd.f32 0.0, %v631
        %v633 = vpop.f32.mrb[0].mxu0
        %634 = vmatprep.mubr.bf16.mxu0 0
        %635 = vmatmul.mubr.bf16.gmra.mrb[0].mxu0 %v481
        %v636 = vpop.f32.mrb[0].mxu0
        %v637 = vadd.f32 0.0, %v636
        %v638 = vpop.f32.mrb[0].mxu0
        %v639 = vpop.f32.mrb[0].mxu0
        %v640 = vadd.f32 0.0, %v639
        %v641 = vpop.f32.mrb[0].mxu0
        %642 = vmatprep.mubr.bf16.mxu0 0
        %643 = vmatmul.mubr.bf16.gmra.mrb[0].mxu0 %v484
        %v644 = vpop.f32.mrb[0].mxu0
        %v645 = vadd.f32 0.0, %v644
        %v646 = vpop.f32.mrb[0].mxu0
        %v647 = vpop.f32.mrb[0].mxu0
        %v648 = vadd.f32 0.0, %v647
        %v649 = vpop.f32.mrb[0].mxu0
        %650 = vdwg.mxu0
        %v683 = vunpack.c.l.b16 %v279
        %v684 = vunpack.c.l.b16 %v280
        %v685 = vunpack.c.l.b16 %v281
        %v686 = vunpack.c.l.b16 %v282
        %v687 = vunpack.c.l.b16 %v283
        %v688 = vunpack.c.l.b16 %v284
        %v689 = vunpack.c.l.b16 %v285
        %v690 = vunpack.c.l.b16 %v286
        %v691 = vunpack.c.l.b16 %v287
        %v692 = vunpack.c.l.b16 %v288
        %v693 = vunpack.c.l.b16 %v289
        %v694 = vunpack.c.l.b16 %v290
        %v695 = vunpack.c.l.b16 %v291
        %v696 = vunpack.c.l.b16 %v292
        %v697 = vunpack.c.l.b16 %v293
        %v698 = vunpack.c.l.b16 %v294
        %v699 = vunpack.c.l.b16 %v295
        %v700 = vunpack.c.l.b16 %v296
        %v701 = vunpack.c.l.b16 %v297
        %v702 = vunpack.c.l.b16 %v298
        %v703 = vunpack.c.l.b16 %v299
        %v704 = vunpack.c.l.b16 %v300
        %v705 = vunpack.c.l.b16 %v301
        %v706 = vunpack.c.l.b16 %v302
        %v707 = vunpack.c.l.b16 %v303
        %v708 = vunpack.c.l.b16 %v304
        %v709 = vunpack.c.l.b16 %v305
        %v710 = vunpack.c.l.b16 %v306
        %v711 = vunpack.c.l.b16 %v307
        %v712 = vunpack.c.l.b16 %v308
        %v713 = vunpack.c.l.b16 %v309
        %v714 = vunpack.c.l.b16 %v310
        %v715 = vpack.c.b16 %v684, %v683
        %v716 = vpack.c.b16 %v686, %v685
        %v717 = vpack.c.b16 %v688, %v687
        %v718 = vpack.c.b16 %v690, %v689
        %v719 = vpack.c.b16 %v692, %v691
        %v720 = vpack.c.b16 %v694, %v693
        %v721 = vpack.c.b16 %v696, %v695
        %v722 = vpack.c.b16 %v698, %v697
        %v723 = vpack.c.b16 %v700, %v699
        %v724 = vpack.c.b16 %v702, %v701
        %v725 = vpack.c.b16 %v704, %v703
        %v726 = vpack.c.b16 %v706, %v705
        %v727 = vpack.c.b16 %v708, %v707
        %v728 = vpack.c.b16 %v710, %v709
        %v729 = vpack.c.b16 %v712, %v711
        %v730 = vpack.c.b16 %v714, %v713
        %v732 = vsel %vm437, %v715, 0
        %v735 = vsel %vm437, %v716, 0
        %v738 = vsel %vm437, %v717, 0
        %v741 = vsel %vm437, %v718, 0
        %v744 = vsel %vm437, %v719, 0
        %v747 = vsel %vm437, %v720, 0
        %v750 = vsel %vm437, %v721, 0
        %v753 = vsel %vm437, %v722, 0
        %v756 = vsel %vm437, %v723, 0
        %v759 = vsel %vm437, %v724, 0
        %v762 = vsel %vm437, %v725, 0
        %v765 = vsel %vm437, %v726, 0
        %v768 = vsel %vm437, %v727, 0
        %v771 = vsel %vm437, %v728, 0
        %v774 = vsel %vm437, %v729, 0
        %v777 = vsel %vm437, %v730, 0
        %v780 = vsel %vm486, %v314, 0
        %782 = vmatprep.subr.bf16.mxu0 0
        %783 = vmatpush1.bf16.msra.mxu0 %v780
        %784 = vmatprep.subr.bf16.mxu0 0
        %785 = vmatpush1.bf16.msra.mxu0 0
        %786 = vmatprep.subr.bf16.mxu0 0
        %787 = vmatpush1.bf16.msra.mxu0 0
        %788 = vmatprep.subr.bf16.mxu0 0
        %789 = vmatpush1.bf16.msra.mxu0 0
        %790 = vmatprep.subr.bf16.mxu0 0
        %791 = vmatpush1.bf16.msra.mxu0 0
        %792 = vmatprep.subr.bf16.mxu0 0
        %793 = vmatpush1.bf16.msra.mxu0 0
        %794 = vmatprep.subr.bf16.mxu0 0
        %795 = vmatpush1.bf16.msra.mxu0 0
        %796 = vmatprep.subr.bf16.mxu0 0
        %797 = vmatpush1.bf16.msra.mxu0 0
        %798 = vmatprep.subr.bf16.mxu0 0
        %799 = vmatpush1.bf16.msra.mxu0 0
        %800 = vmatprep.subr.bf16.mxu0 0
        %801 = vmatpush1.bf16.msra.mxu0 0
        %802 = vmatprep.subr.bf16.mxu0 0
        %803 = vmatpush1.bf16.msra.mxu0 0
        %804 = vmatprep.subr.bf16.mxu0 0
        %805 = vmatpush1.bf16.msra.mxu0 0
        %806 = vmatprep.subr.bf16.mxu0 0
        %807 = vmatpush1.bf16.msra.mxu0 0
        %808 = vmatprep.subr.bf16.mxu0 0
        %809 = vmatpush1.bf16.msra.mxu0 0
        %810 = vmatprep.subr.bf16.mxu0 0
        %811 = vmatpush1.bf16.msra.mxu0 0
        %812 = vmatprep.subr.bf16.mxu0 0
        %813 = vmatpush1.bf16.msra.mxu0 0
        %814 = vmatprep.mubr.bf16.mxu0 0
        %815 = vmatmul.mubr.bf16.gmra.mrb[0].mxu0 %v732
        %v816 = vpop.f32.mrb[0].mxu0
        %v817 = vadd.f32 %v525, %v816
        %v818 = vpop.f32.mrb[0].mxu0
        %v819 = vpop.f32.mrb[0].mxu0
        %v820 = vadd.f32 %v528, %v819
        %v821 = vpop.f32.mrb[0].mxu0
        %822 = vmatprep.mubr.bf16.mxu0 0
        %823 = vmatmul.mubr.bf16.gmra.mrb[0].mxu0 %v735
        %v824 = vpop.f32.mrb[0].mxu0
        %v825 = vadd.f32 %v533, %v824
        %v826 = vpop.f32.mrb[0].mxu0
        %v827 = vpop.f32.mrb[0].mxu0
        %v828 = vadd.f32 %v536, %v827
        %v829 = vpop.f32.mrb[0].mxu0
        %830 = vmatprep.mubr.bf16.mxu0 0
        %831 = vmatmul.mubr.bf16.gmra.mrb[0].mxu0 %v738
        %v832 = vpop.f32.mrb[0].mxu0
        %v833 = vadd.f32 %v541, %v832
        %v834 = vpop.f32.mrb[0].mxu0
        %v835 = vpop.f32.mrb[0].mxu0
        %v836 = vadd.f32 %v544, %v835
        %v837 = vpop.f32.mrb[0].mxu0
        %838 = vmatprep.mubr.bf16.mxu0 0
        %839 = vmatmul.mubr.bf16.gmra.mrb[0].mxu0 %v741
        %v840 = vpop.f32.mrb[0].mxu0
        %v841 = vadd.f32 %v549, %v840
        %v842 = vpop.f32.mrb[0].mxu0
        %v843 = vpop.f32.mrb[0].mxu0
        %v844 = vadd.f32 %v552, %v843
        %v845 = vpop.f32.mrb[0].mxu0
        %846 = vmatprep.mubr.bf16.mxu0 0
        %847 = vmatmul.mubr.bf16.gmra.mrb[0].mxu0 %v744
        %v848 = vpop.f32.mrb[0].mxu0
        %v849 = vadd.f32 %v557, %v848
        %v850 = vpop.f32.mrb[0].mxu0
        %v851 = vpop.f32.mrb[0].mxu0
        %v852 = vadd.f32 %v560, %v851
        %v853 = vpop.f32.mrb[0].mxu0
        %854 = vmatprep.mubr.bf16.mxu0 0
        %855 = vmatmul.mubr.bf16.gmra.mrb[0].mxu0 %v747
        %v856 = vpop.f32.mrb[0].mxu0
        %v857 = vadd.f32 %v565, %v856
        %v858 = vpop.f32.mrb[0].mxu0
        %v859 = vpop.f32.mrb[0].mxu0
        %v860 = vadd.f32 %v568, %v859
        %v861 = vpop.f32.mrb[0].mxu0
        %862 = vmatprep.mubr.bf16.mxu0 0
        %863 = vmatmul.mubr.bf16.gmra.mrb[0].mxu0 %v750
        %v864 = vpop.f32.mrb[0].mxu0
        %v865 = vadd.f32 %v573, %v864
        %v866 = vpop.f32.mrb[0].mxu0
        %v867 = vpop.f32.mrb[0].mxu0
        %v868 = vadd.f32 %v576, %v867
        %v869 = vpop.f32.mrb[0].mxu0
        %870 = vmatprep.mubr.bf16.mxu0 0
        %871 = vmatmul.mubr.bf16.gmra.mrb[0].mxu0 %v753
        %v872 = vpop.f32.mrb[0].mxu0
        %v873 = vadd.f32 %v581, %v872
        %v874 = vpop.f32.mrb[0].mxu0
        %v875 = vpop.f32.mrb[0].mxu0
        %v876 = vadd.f32 %v584, %v875
        %v877 = vpop.f32.mrb[0].mxu0
        %878 = vmatprep.mubr.bf16.mxu0 0
        %879 = vmatmul.mubr.bf16.gmra.mrb[0].mxu0 %v756
        %v880 = vpop.f32.mrb[0].mxu0
        %v881 = vadd.f32 %v589, %v880
        %v882 = vpop.f32.mrb[0].mxu0
        %v883 = vpop.f32.mrb[0].mxu0
        %v884 = vadd.f32 %v592, %v883
        %v885 = vpop.f32.mrb[0].mxu0
        %886 = vmatprep.mubr.bf16.mxu0 0
        %887 = vmatmul.mubr.bf16.gmra.mrb[0].mxu0 %v759
        %v888 = vpop.f32.mrb[0].mxu0
        %v889 = vadd.f32 %v597, %v888
        %v890 = vpop.f32.mrb[0].mxu0
        %v891 = vpop.f32.mrb[0].mxu0
        %v892 = vadd.f32 %v600, %v891
        %v893 = vpop.f32.mrb[0].mxu0
        %894 = vmatprep.mubr.bf16.mxu0 0
        %895 = vmatmul.mubr.bf16.gmra.mrb[0].mxu0 %v762
        %v896 = vpop.f32.mrb[0].mxu0
        %v897 = vadd.f32 %v605, %v896
        %v898 = vpop.f32.mrb[0].mxu0
        %v899 = vpop.f32.mrb[0].mxu0
        %v900 = vadd.f32 %v608, %v899
        %v901 = vpop.f32.mrb[0].mxu0
        %902 = vmatprep.mubr.bf16.mxu0 0
        %903 = vmatmul.mubr.bf16.gmra.mrb[0].mxu0 %v765
        %v904 = vpop.f32.mrb[0].mxu0
        %v905 = vadd.f32 %v613, %v904
        %v906 = vpop.f32.mrb[0].mxu0
        %v907 = vpop.f32.mrb[0].mxu0
        %v908 = vadd.f32 %v616, %v907
        %v909 = vpop.f32.mrb[0].mxu0
        %910 = vmatprep.mubr.bf16.mxu0 0
        %911 = vmatmul.mubr.bf16.gmra.mrb[0].mxu0 %v768
        %v912 = vpop.f32.mrb[0].mxu0
        %v913 = vadd.f32 %v621, %v912
        %v914 = vpop.f32.mrb[0].mxu0
        %v915 = vpop.f32.mrb[0].mxu0
        %v916 = vadd.f32 %v624, %v915
        %v917 = vpop.f32.mrb[0].mxu0
        %918 = vmatprep.mubr.bf16.mxu0 0
        %919 = vmatmul.mubr.bf16.gmra.mrb[0].mxu0 %v771
        %v920 = vpop.f32.mrb[0].mxu0
        %v921 = vadd.f32 %v629, %v920
        %v922 = vpop.f32.mrb[0].mxu0
        %v923 = vpop.f32.mrb[0].mxu0
        %v924 = vadd.f32 %v632, %v923
        %v925 = vpop.f32.mrb[0].mxu0
        %926 = vmatprep.mubr.bf16.mxu0 0
        %927 = vmatmul.mubr.bf16.gmra.mrb[0].mxu0 %v774
        %v928 = vpop.f32.mrb[0].mxu0
        %v929 = vadd.f32 %v637, %v928
        %v930 = vpop.f32.mrb[0].mxu0
        %v931 = vpop.f32.mrb[0].mxu0
        %v932 = vadd.f32 %v640, %v931
        %v933 = vpop.f32.mrb[0].mxu0
        %934 = vmatprep.mubr.bf16.mxu0 0
        %935 = vmatmul.mubr.bf16.gmra.mrb[0].mxu0 %v777
        %v936 = vpop.f32.mrb[0].mxu0
        %v937 = vadd.f32 %v645, %v936
        %v938 = vpop.f32.mrb[0].mxu0
        %v939 = vpop.f32.mrb[0].mxu0
        %v940 = vadd.f32 %v648, %v939
        %v941 = vpop.f32.mrb[0].mxu0
        %942 = vdwg.mxu0
        %v943 = vpack.c.bf16 %v820, %v817
        %v944 = vpack.c.bf16 %v828, %v825
        %v945 = vpack.c.bf16 %v836, %v833
        %v946 = vpack.c.bf16 %v844, %v841
        %v947 = vpack.c.bf16 %v852, %v849
        %v948 = vpack.c.bf16 %v860, %v857
        %v949 = vpack.c.bf16 %v868, %v865
        %v950 = vpack.c.bf16 %v876, %v873
        %v951 = vpack.c.bf16 %v884, %v881
        %v952 = vpack.c.bf16 %v892, %v889
        %v953 = vpack.c.bf16 %v900, %v897
        %v954 = vpack.c.bf16 %v908, %v905
        %v955 = vpack.c.bf16 %v916, %v913
        %v956 = vpack.c.bf16 %v924, %v921
        %v957 = vpack.c.bf16 %v932, %v929
        %v958 = vpack.c.bf16 %v940, %v937
        %v975 = vunpack.c.l.b16 %v943
        %v976 = vunpack.c.h.b16 %v943
        %v977 = vunpack.c.l.b16 %v944
        %v978 = vunpack.c.h.b16 %v944
        %v979 = vunpack.c.l.b16 %v945
        %v980 = vunpack.c.h.b16 %v945
        %v981 = vunpack.c.l.b16 %v946
        %v982 = vunpack.c.h.b16 %v946
        %v983 = vunpack.c.l.b16 %v947
        %v984 = vunpack.c.h.b16 %v947
        %v985 = vunpack.c.l.b16 %v948
        %v986 = vunpack.c.h.b16 %v948
        %v987 = vunpack.c.l.b16 %v949
        %v988 = vunpack.c.h.b16 %v949
        %v989 = vunpack.c.l.b16 %v950
        %v990 = vunpack.c.h.b16 %v950
        %v991 = vunpack.c.l.b16 %v951
        %v992 = vunpack.c.h.b16 %v951
        %v993 = vunpack.c.l.b16 %v952
        %v994 = vunpack.c.h.b16 %v952
        %v995 = vunpack.c.l.b16 %v953
        %v996 = vunpack.c.h.b16 %v953
        %v997 = vunpack.c.l.b16 %v954
        %v998 = vunpack.c.h.b16 %v954
        %v999 = vunpack.c.l.b16 %v955
        %v1000 = vunpack.c.h.b16 %v955
        %v1001 = vunpack.c.l.b16 %v956
        %v1002 = vunpack.c.h.b16 %v956
        %v1003 = vunpack.c.l.b16 %v957
        %v1004 = vunpack.c.h.b16 %v957
        %v1005 = vunpack.c.l.b16 %v958
        %v1006 = vunpack.c.h.b16 %v958
        %v1007 = vpack.c.b16 %v975, %v975
        %v1008 = vpack.c.b16 %v976, %v976
        %v1009 = vpack.c.b16 %v977, %v977
        %v1010 = vpack.c.b16 %v978, %v978
        %v1011 = vpack.c.b16 %v979, %v979
        %v1012 = vpack.c.b16 %v980, %v980
        %v1013 = vpack.c.b16 %v981, %v981
        %v1014 = vpack.c.b16 %v982, %v982
        %v1015 = vpack.c.b16 %v983, %v983
        %v1016 = vpack.c.b16 %v984, %v984
        %v1017 = vpack.c.b16 %v985, %v985
        %v1018 = vpack.c.b16 %v986, %v986
        %v1019 = vpack.c.b16 %v987, %v987
        %v1020 = vpack.c.b16 %v988, %v988
        %v1021 = vpack.c.b16 %v989, %v989
        %v1022 = vpack.c.b16 %v990, %v990
        %v1023 = vpack.c.b16 %v991, %v991
        %v1024 = vpack.c.b16 %v992, %v992
        %v1025 = vpack.c.b16 %v993, %v993
        %v1026 = vpack.c.b16 %v994, %v994
        %v1027 = vpack.c.b16 %v995, %v995
        %v1028 = vpack.c.b16 %v996, %v996
        %v1029 = vpack.c.b16 %v997, %v997
        %v1030 = vpack.c.b16 %v998, %v998
        %v1031 = vpack.c.b16 %v999, %v999
        %v1032 = vpack.c.b16 %v1000, %v1000
        %v1033 = vpack.c.b16 %v1001, %v1001
        %v1034 = vpack.c.b16 %v1002, %v1002
        %v1035 = vpack.c.b16 %v1003, %v1003
        %v1036 = vpack.c.b16 %v1004, %v1004
        %v1037 = vpack.c.b16 %v1005, %v1005
        %v1038 = vpack.c.b16 %v1006, %v1006
        %1071 = vst [vmem:[%s223] sm:$0xf] %v1007
        %1072 = vst [vmem:[%s223 + $0x4] sm:$0xf] %v1008
        %1073 = vst [vmem:[%s223 + $0x8] sm:$0xf] %v1009
        %1074 = vst [vmem:[%s223 + $0xc] sm:$0xf] %v1010
        %1075 = vst [vmem:[%s223 + $0x10] sm:$0xf] %v1011
        %1076 = vst [vmem:[%s223 + $0x14] sm:$0xf] %v1012
        %1077 = vst [vmem:[%s223 + $0x18] sm:$0xf] %v1013
        %1078 = vst [vmem:[%s223 + $0x1c] sm:$0xf] %v1014
        %1079 = vst [vmem:[%s223 + $0x20] sm:$0xf] %v1015
        %1080 = vst [vmem:[%s223 + $0x24] sm:$0xf] %v1016
        %1081 = vst [vmem:[%s223 + $0x28] sm:$0xf] %v1017
        %1082 = vst [vmem:[%s223 + $0x2c] sm:$0xf] %v1018
        %1083 = vst [vmem:[%s223 + $0x30] sm:$0xf] %v1019
        %1084 = vst [vmem:[%s223 + $0x34] sm:$0xf] %v1020
        %1085 = vst [vmem:[%s223 + $0x38] sm:$0xf] %v1021
        %1086 = vst [vmem:[%s223 + $0x3c] sm:$0xf] %v1022
        %1087 = vst [vmem:[%s223 + $0x40] sm:$0xf] %v1023
        %1088 = vst [vmem:[%s223 + $0x44] sm:$0xf] %v1024
        %1089 = vst [vmem:[%s223 + $0x48] sm:$0xf] %v1025
        %1090 = vst [vmem:[%s223 + $0x4c] sm:$0xf] %v1026
        %1091 = vst [vmem:[%s223 + $0x50] sm:$0xf] %v1027
        %1092 = vst [vmem:[%s223 + $0x54] sm:$0xf] %v1028
        %1093 = vst [vmem:[%s223 + $0x58] sm:$0xf] %v1029
        %1094 = vst [vmem:[%s223 + $0x5c] sm:$0xf] %v1030
        %1095 = vst [vmem:[%s223 + $0x60] sm:$0xf] %v1031
        %1096 = vst [vmem:[%s223 + $0x64] sm:$0xf] %v1032
        %1097 = vst [vmem:[%s223 + $0x68] sm:$0xf] %v1033
        %1098 = vst [vmem:[%s223 + $0x6c] sm:$0xf] %v1034
        %1099 = vst [vmem:[%s223 + $0x70] sm:$0xf] %v1035
        %1100 = vst [vmem:[%s223 + $0x74] sm:$0xf] %v1036
        %1101 = vst [vmem:[%s223 + $0x78] sm:$0xf] %v1037
        %1102 = vst [vmem:[%s223 + $0x7c] sm:$0xf] %v1038
        %v1103 = vadd.f32 %v817, %v820
        %v1104 = vadd.f32 %v1103, %v825
        %v1105 = vadd.f32 %v1104, %v828
        %v1106 = vadd.f32 %v1105, %v833
        %v1107 = vadd.f32 %v1106, %v836
        %v1108 = vadd.f32 %v1107, %v841
        %v1109 = vadd.f32 %v1108, %v844
        %v1110 = vadd.f32 %v1109, %v849
        %v1111 = vadd.f32 %v1110, %v852
        %v1112 = vadd.f32 %v1111, %v857
        %v1113 = vadd.f32 %v1112, %v860
        %v1114 = vadd.f32 %v1113, %v865
        %v1115 = vadd.f32 %v1114, %v868
        %v1116 = vadd.f32 %v1115, %v873
        %v1117 = vadd.f32 %v1116, %v876
        %v1118 = vadd.f32 %v1117, %v881
        %v1119 = vadd.f32 %v1118, %v884
        %v1120 = vadd.f32 %v1119, %v889
        %v1121 = vadd.f32 %v1120, %v892
        %v1122 = vadd.f32 %v1121, %v897
        %v1123 = vadd.f32 %v1122, %v900
        %v1124 = vadd.f32 %v1123, %v905
        %v1125 = vadd.f32 %v1124, %v908
        %v1126 = vadd.f32 %v1125, %v913
        %v1127 = vadd.f32 %v1126, %v916
        %v1128 = vadd.f32 %v1127, %v921
        %v1129 = vadd.f32 %v1128, %v924
        %v1130 = vadd.f32 %v1129, %v929
        %v1131 = vadd.f32 %v1130, %v932
        %v1132 = vadd.f32 %v1131, %v937
        %v1133 = vadd.f32 %v1132, %v940
        %v1134 = vrot.slane %v1133, 4
        %v1135 = vadd.f32 %v1133, %v1134
        %v1136 = vrot.slane %v1135, 2
        %v1137 = vadd.f32 %v1135, %v1136
        %v1138 = vrot.slane %v1137, 1
        %v1139 = vadd.f32 %v1137, %v1138
        %1140 = vst [vmem:[%s270] sm:$0x1] %v1139
        %v1141 = vmul.f32 %v817, %v817
        %v1142 = vmul.f32 %v820, %v820
        %v1143 = vmul.f32 %v825, %v825
        %v1144 = vmul.f32 %v828, %v828
        %v1145 = vmul.f32 %v833, %v833
        %v1146 = vmul.f32 %v836, %v836
        %v1147 = vmul.f32 %v841, %v841
        %v1148 = vmul.f32 %v844, %v844
        %v1149 = vmul.f32 %v849, %v849
        %v1150 = vmul.f32 %v852, %v852
        %v1151 = vmul.f32 %v857, %v857
        %v1152 = vmul.f32 %v860, %v860
        %v1153 = vmul.f32 %v865, %v865
        %v1154 = vmul.f32 %v868, %v868
        %v1155 = vmul.f32 %v873, %v873
        %v1156 = vmul.f32 %v876, %v876
        %v1157 = vmul.f32 %v881, %v881
        %v1158 = vmul.f32 %v884, %v884
        %v1159 = vmul.f32 %v889, %v889
        %v1160 = vmul.f32 %v892, %v892
        %v1161 = vmul.f32 %v897, %v897
        %v1162 = vmul.f32 %v900, %v900
        %v1163 = vmul.f32 %v905, %v905
        %v1164 = vmul.f32 %v908, %v908
        %v1165 = vmul.f32 %v913, %v913
        %v1166 = vmul.f32 %v916, %v916
        %v1167 = vmul.f32 %v921, %v921
        %v1168 = vmul.f32 %v924, %v924
        %v1169 = vmul.f32 %v929, %v929
        %v1170 = vmul.f32 %v932, %v932
        %v1171 = vmul.f32 %v937, %v937
        %v1172 = vmul.f32 %v940, %v940
        %v1173 = vadd.f32 %v1141, %v1142
        %v1174 = vadd.f32 %v1173, %v1143
        %v1175 = vadd.f32 %v1174, %v1144
        %v1176 = vadd.f32 %v1175, %v1145
        %v1177 = vadd.f32 %v1176, %v1146
        %v1178 = vadd.f32 %v1177, %v1147
        %v1179 = vadd.f32 %v1178, %v1148
        %v1180 = vadd.f32 %v1179, %v1149
        %v1181 = vadd.f32 %v1180, %v1150
        %v1182 = vadd.f32 %v1181, %v1151
        %v1183 = vadd.f32 %v1182, %v1152
        %v1184 = vadd.f32 %v1183, %v1153
        %v1185 = vadd.f32 %v1184, %v1154
        %v1186 = vadd.f32 %v1185, %v1155
        %v1187 = vadd.f32 %v1186, %v1156
        %v1188 = vadd.f32 %v1187, %v1157
        %v1189 = vadd.f32 %v1188, %v1158
        %v1190 = vadd.f32 %v1189, %v1159
        %v1191 = vadd.f32 %v1190, %v1160
        %v1192 = vadd.f32 %v1191, %v1161
        %v1193 = vadd.f32 %v1192, %v1162
        %v1194 = vadd.f32 %v1193, %v1163
        %v1195 = vadd.f32 %v1194, %v1164
        %v1196 = vadd.f32 %v1195, %v1165
        %v1197 = vadd.f32 %v1196, %v1166
        %v1198 = vadd.f32 %v1197, %v1167
        %v1199 = vadd.f32 %v1198, %v1168
        %v1200 = vadd.f32 %v1199, %v1169
        %v1201 = vadd.f32 %v1200, %v1170
        %v1202 = vadd.f32 %v1201, %v1171
        %v1203 = vadd.f32 %v1202, %v1172
        %v1204 = vrot.slane %v1203, 4
        %v1205 = vadd.f32 %v1203, %v1204
        %v1206 = vrot.slane %v1205, 2
        %v1207 = vadd.f32 %v1205, %v1206
        %v1208 = vrot.slane %v1207, 1
        %v1209 = vadd.f32 %v1207, %v1208
        %1210 = vst [vmem:[%s270 + $0x1] sm:$0x1] %v1209
        %s1211 = sand.u32 %s109, 1
        %s1212 = sand.u32 %s109, 1
        %s1213 = smul.addr %s1212, 128
        %s1214 = scalar_lea.vmem [#allocation2], %s1213
        %p1215 = scmp.lt.s32.totalorder %s21, 1
        %s1216 = scalar_select %p1215, %s21, 1
        %p1217 = scmp.lt.s32.totalorder %s23, 1
        %s1218 = scalar_select %p1217, %s23, 1
        %p1219 = scmp.lt.s32.totalorder %s22, 1
        %s1220 = scalar_select %p1219, %s22, 1
        %p1221 = scmp.lt.s32.totalorder %s24, 0
        %s1222 = scalar_select %p1221, %s24, 0
        %s1223 = sadd.s32 %s1222, %s1220
        %s1224 = smul.addr %s1218, 2
        %s1225 = sadd.s32 %s1223, %s1224
        %s1226 = smul.addr %s1216, 4
        %s1227 = sadd.s32 %s1225, %s1226
        %s1228 = smul.addr %s1227, 2
        %s1229 = scalar_lea.vmem %s3, %s1228
        // Predicated region
        $region29: #{decoder_block_forward.2} parent=27 // pred_check
          %p1230 = pneg %p119
        $region30: #{decoder_block_forward.2} parent=27 // pred_check_branch
          %1232 = sbr.rel (%p1230) target = $region32
        $region31: #{decoder_block_forward.2} parent=27 // pred_region
          %s1233 = smul.u32 16, %s24
          %s1234 = smul.addr %s23, 4
          %s1235 = sadd.s32 %s21, %s1234
          %s1236 = smul.addr %s1233, 8
          %s1237 = sadd.s32 %s1235, %s1236
          %s1238 = smul.addr %s22, 128
          %s1239 = sadd.s32 %s1237, %s1238
          %s1240 = smul.addr %s1239, 4
          %s1241 = scalar_lea.vmem %s2, %s1240
          // Predicated region
          $region33: #{decoder_block_forward.2} parent=31 // pred_check
            _
          $region34: #{decoder_block_forward.2} parent=31 // pred_check_branch
            %1243 = sbr.rel (0) target = $region36
          $region35: #{decoder_block_forward.2} parent=31 // pred_region
            // Predicated region
            $region37: #{decoder_block_forward.2} parent=35 // pred_check
              _
            $region38: #{decoder_block_forward.2} parent=35 // pred_check_branch
              %1245 = sbr.rel target = $region40
            $region39: #{decoder_block_forward.2} parent=35 // pred_region
              // Predicated region
              $region52: #{decoder_block_forward.2} parent=39 // pred_check
                _
              $region53: #{decoder_block_forward.2} parent=39 // pred_check_branch
                %1322 = sbr.rel (0) target = $region55
              $region54: #{decoder_block_forward.2} parent=39 // pred_region
                loop: start=0, step=1, limit=1
                $region56: #{decoder_block_forward.2} parent=54 // loop_pre_header
                  _
                $region57: #{decoder_block_forward.2} parent=54 // loop_header
                  %s1324 = sphi 0, %s1328
                  %p1325 = scmp.ge.s32.totalorder %s1324, 1
                  %s1329 = sphi %s1214, %s1214
                  %s1330 = sphi %s1241, %s1241
                $region58: #{decoder_block_forward.2} parent=54 // loop_header_branch
                  %1327 = sbr.rel (%p1325) target = $region62
                $region59: #{decoder_block_forward.2} parent=54 // loop_body
                  _
                $region60: #{decoder_block_forward.2} parent=54 // loop_footer
                  %s1328 = sadd.s32 1, %s1324
                $region61: #{decoder_block_forward.2} parent=54 // loop_footer_branch
                  %1323 = sbr.rel target = $region57
                $region62: #{decoder_block_forward.2} parent=54 // loop_exit
                  _
                loop: start=0, step=1, limit=1
                $region63: #{decoder_block_forward.2} parent=54 // loop_pre_header
                  _
                $region64: #{decoder_block_forward.2} parent=54 // loop_header
                  %s1333 = sphi 0, %s1337
                  %p1334 = scmp.ge.s32.totalorder %s1333, 1
                  %s1338 = sphi %s1214, %s1214
                  %s1339 = sphi %s1241, %s1241
                $region65: #{decoder_block_forward.2} parent=54 // loop_header_branch
                  %1336 = sbr.rel (%p1334) target = $region69
                $region66: #{decoder_block_forward.2} parent=54 // loop_body
                  %v1340 = vld [vmem:[%s1338] sm:$0xf]
                  %1341 = vst [vmem:[%s1339] sm:$0xf] %v1340
                  %v1342 = vld [vmem:[%s1338 + $0x4] sm:$0xf]
                  %1343 = vst [vmem:[%s1339 + $0x8] sm:$0xf] %v1342
                  %v1344 = vld [vmem:[%s1338 + $0x8] sm:$0xf]
                  %1345 = vst [vmem:[%s1339 + $0x20] sm:$0xf] %v1344
                  %v1346 = vld [vmem:[%s1338 + $0xc] sm:$0xf]
                  %1347 = vst [vmem:[%s1339 + $0x28] sm:$0xf] %v1346
                  %v1348 = vld [vmem:[%s1338 + $0x10] sm:$0xf]
                  %1349 = vst [vmem:[%s1339 + $0x40] sm:$0xf] %v1348
                  %v1350 = vld [vmem:[%s1338 + $0x14] sm:$0xf]
                  %1351 = vst [vmem:[%s1339 + $0x48] sm:$0xf] %v1350
                  %v1352 = vld [vmem:[%s1338 + $0x18] sm:$0xf]
                  %1353 = vst [vmem:[%s1339 + $0x60] sm:$0xf] %v1352
                  %v1354 = vld [vmem:[%s1338 + $0x1c] sm:$0xf]
                  %1355 = vst [vmem:[%s1339 + $0x68] sm:$0xf] %v1354
                  %v1356 = vld [vmem:[%s1338 + $0x20] sm:$0xf]
                  %1357 = vst [vmem:[%s1339 + $0x80] sm:$0xf] %v1356
                  %v1358 = vld [vmem:[%s1338 + $0x24] sm:$0xf]
                  %1359 = vst [vmem:[%s1339 + $0x88] sm:$0xf] %v1358
                  %v1360 = vld [vmem:[%s1338 + $0x28] sm:$0xf]
                  %1361 = vst [vmem:[%s1339 + $0xa0] sm:$0xf] %v1360
                  %v1362 = vld [vmem:[%s1338 + $0x2c] sm:$0xf]
                  %1363 = vst [vmem:[%s1339 + $0xa8] sm:$0xf] %v1362
                  %v1364 = vld [vmem:[%s1338 + $0x30] sm:$0xf]
                  %1365 = vst [vmem:[%s1339 + $0xc0] sm:$0xf] %v1364
                  %v1366 = vld [vmem:[%s1338 + $0x34] sm:$0xf]
                  %1367 = vst [vmem:[%s1339 + $0xc8] sm:$0xf] %v1366
                  %v1368 = vld [vmem:[%s1338 + $0x38] sm:$0xf]
                  %1369 = vst [vmem:[%s1339 + $0xe0] sm:$0xf] %v1368
                  %v1370 = vld [vmem:[%s1338 + $0x3c] sm:$0xf]
                  %1371 = vst [vmem:[%s1339 + $0xe8] sm:$0xf] %v1370
                  %v1372 = vld [vmem:[%s1338 + $0x40] sm:$0xf]
                  %1373 = vst [vmem:[%s1339 + $0x100] sm:$0xf] %v1372
                  %v1374 = vld [vmem:[%s1338 + $0x44] sm:$0xf]
                  %1375 = vst [vmem:[%s1339 + $0x108] sm:$0xf] %v1374
                  %v1376 = vld [vmem:[%s1338 + $0x48] sm:$0xf]
                  %1377 = vst [vmem:[%s1339 + $0x120] sm:$0xf] %v1376
                  %v1378 = vld [vmem:[%s1338 + $0x4c] sm:$0xf]
                  %1379 = vst [vmem:[%s1339 + $0x128] sm:$0xf] %v1378
                  %v1380 = vld [vmem:[%s1338 + $0x50] sm:$0xf]
                  %1381 = vst [vmem:[%s1339 + $0x140] sm:$0xf] %v1380
                  %v1382 = vld [vmem:[%s1338 + $0x54] sm:$0xf]
                  %1383 = vst [vmem:[%s1339 + $0x148] sm:$0xf] %v1382
                  %v1384 = vld [vmem:[%s1338 + $0x58] sm:$0xf]
                  %1385 = vst [vmem:[%s1339 + $0x160] sm:$0xf] %v1384
                  %v1386 = vld [vmem:[%s1338 + $0x5c] sm:$0xf]
                  %1387 = vst [vmem:[%s1339 + $0x168] sm:$0xf] %v1386
                  %v1388 = vld [vmem:[%s1338 + $0x60] sm:$0xf]
                  %1389 = vst [vmem:[%s1339 + $0x180] sm:$0xf] %v1388
                  %v1390 = vld [vmem:[%s1338 + $0x64] sm:$0xf]
                  %1391 = vst [vmem:[%s1339 + $0x188] sm:$0xf] %v1390
                  %v1392 = vld [vmem:[%s1338 + $0x68] sm:$0xf]
                  %1393 = vst [vmem:[%s1339 + $0x1a0] sm:$0xf] %v1392
                  %v1394 = vld [vmem:[%s1338 + $0x6c] sm:$0xf]
                  %1395 = vst [vmem:[%s1339 + $0x1a8] sm:$0xf] %v1394
                  %v1396 = vld [vmem:[%s1338 + $0x70] sm:$0xf]
                  %1397 = vst [vmem:[%s1339 + $0x1c0] sm:$0xf] %v1396
                  %v1398 = vld [vmem:[%s1338 + $0x74] sm:$0xf]
                  %1399 = vst [vmem:[%s1339 + $0x1c8] sm:$0xf] %v1398
                  %v1400 = vld [vmem:[%s1338 + $0x78] sm:$0xf]
                  %1401 = vst [vmem:[%s1339 + $0x1e0] sm:$0xf] %v1400
                  %v1402 = vld [vmem:[%s1338 + $0x7c] sm:$0xf]
                  %1403 = vst [vmem:[%s1339 + $0x1e8] sm:$0xf] %v1402
                $region67: #{decoder_block_forward.2} parent=54 // loop_footer
                  %s1337 = sadd.s32 1, %s1333
                $region68: #{decoder_block_forward.2} parent=54 // loop_footer_branch
                  %1332 = sbr.rel target = $region64
                $region69: #{decoder_block_forward.2} parent=54 // loop_exit
                  _
              $region55: #{decoder_block_forward.2} parent=39 // pred_fallthru
                _
            $region40: #{decoder_block_forward.2} parent=35 // pred_fallthru
              _
            // Predicated region
            $region41: #{decoder_block_forward.2} parent=35 // pred_check
              _
            $region42: #{decoder_block_forward.2} parent=35 // pred_check_branch
              %1247 = sbr.rel (0) target = $region44
            $region43: #{decoder_block_forward.2} parent=35 // pred_region
              loop: start=0, step=1, limit=1
              $region45: #{decoder_block_forward.2} parent=43 // loop_pre_header
                _
              $region46: #{decoder_block_forward.2} parent=43 // loop_header
                %s1250 = sphi 0, %s1254
                %p1251 = scmp.ge.s32.totalorder %s1250, 1
                %s1255 = sphi %s1214, %s1214
                %s1256 = sphi %s1241, %s1241
              $region47: #{decoder_block_forward.2} parent=43 // loop_header_branch
                %1253 = sbr.rel (%p1251) target = $region51
              $region48: #{decoder_block_forward.2} parent=43 // loop_body
                %v1257 = vld [vmem:[%s1255] sm:$0xf]
                %1258 = vst [vmem:[%s1256] sm:$0xf] %v1257
                %v1259 = vld [vmem:[%s1255 + $0x4] sm:$0xf]
                %1260 = vst [vmem:[%s1256 + $0x8] sm:$0xf] %v1259
                %v1261 = vld [vmem:[%s1255 + $0x8] sm:$0xf]
                %1262 = vst [vmem:[%s1256 + $0x20] sm:$0xf] %v1261
                %v1263 = vld [vmem:[%s1255 + $0xc] sm:$0xf]
                %1264 = vst [vmem:[%s1256 + $0x28] sm:$0xf] %v1263
                %v1265 = vld [vmem:[%s1255 + $0x10] sm:$0xf]
                %1266 = vst [vmem:[%s1256 + $0x40] sm:$0xf] %v1265
                %v1267 = vld [vmem:[%s1255 + $0x14] sm:$0xf]
                %1268 = vst [vmem:[%s1256 + $0x48] sm:$0xf] %v1267
                %v1269 = vld [vmem:[%s1255 + $0x18] sm:$0xf]
                %1270 = vst [vmem:[%s1256 + $0x60] sm:$0xf] %v1269
                %v1271 = vld [vmem:[%s1255 + $0x1c] sm:$0xf]
                %1272 = vst [vmem:[%s1256 + $0x68] sm:$0xf] %v1271
                %v1273 = vld [vmem:[%s1255 + $0x20] sm:$0xf]
                %1274 = vst [vmem:[%s1256 + $0x80] sm:$0xf] %v1273
                %v1275 = vld [vmem:[%s1255 + $0x24] sm:$0xf]
                %1276 = vst [vmem:[%s1256 + $0x88] sm:$0xf] %v1275
                %v1277 = vld [vmem:[%s1255 + $0x28] sm:$0xf]
                %1278 = vst [vmem:[%s1256 + $0xa0] sm:$0xf] %v1277
                %v1279 = vld [vmem:[%s1255 + $0x2c] sm:$0xf]
                %1280 = vst [vmem:[%s1256 + $0xa8] sm:$0xf] %v1279
                %v1281 = vld [vmem:[%s1255 + $0x30] sm:$0xf]
                %1282 = vst [vmem:[%s1256 + $0xc0] sm:$0xf] %v1281
                %v1283 = vld [vmem:[%s1255 + $0x34] sm:$0xf]
                %1284 = vst [vmem:[%s1256 + $0xc8] sm:$0xf] %v1283
                %v1285 = vld [vmem:[%s1255 + $0x38] sm:$0xf]
                %1286 = vst [vmem:[%s1256 + $0xe0] sm:$0xf] %v1285
                %v1287 = vld [vmem:[%s1255 + $0x3c] sm:$0xf]
                %1288 = vst [vmem:[%s1256 + $0xe8] sm:$0xf] %v1287
                %v1289 = vld [vmem:[%s1255 + $0x40] sm:$0xf]
                %1290 = vst [vmem:[%s1256 + $0x100] sm:$0xf] %v1289
                %v1291 = vld [vmem:[%s1255 + $0x44] sm:$0xf]
                %1292 = vst [vmem:[%s1256 + $0x108] sm:$0xf] %v1291
                %v1293 = vld [vmem:[%s1255 + $0x48] sm:$0xf]
                %1294 = vst [vmem:[%s1256 + $0x120] sm:$0xf] %v1293
                %v1295 = vld [vmem:[%s1255 + $0x4c] sm:$0xf]
                %1296 = vst [vmem:[%s1256 + $0x128] sm:$0xf] %v1295
                %v1297 = vld [vmem:[%s1255 + $0x50] sm:$0xf]
                %1298 = vst [vmem:[%s1256 + $0x140] sm:$0xf] %v1297
                %v1299 = vld [vmem:[%s1255 + $0x54] sm:$0xf]
                %1300 = vst [vmem:[%s1256 + $0x148] sm:$0xf] %v1299
                %v1301 = vld [vmem:[%s1255 + $0x58] sm:$0xf]
                %1302 = vst [vmem:[%s1256 + $0x160] sm:$0xf] %v1301
                %v1303 = vld [vmem:[%s1255 + $0x5c] sm:$0xf]
                %1304 = vst [vmem:[%s1256 + $0x168] sm:$0xf] %v1303
                %v1305 = vld [vmem:[%s1255 + $0x60] sm:$0xf]
                %1306 = vst [vmem:[%s1256 + $0x180] sm:$0xf] %v1305
                %v1307 = vld [vmem:[%s1255 + $0x64] sm:$0xf]
                %1308 = vst [vmem:[%s1256 + $0x188] sm:$0xf] %v1307
                %v1309 = vld [vmem:[%s1255 + $0x68] sm:$0xf]
                %1310 = vst [vmem:[%s1256 + $0x1a0] sm:$0xf] %v1309
                %v1311 = vld [vmem:[%s1255 + $0x6c] sm:$0xf]
                %1312 = vst [vmem:[%s1256 + $0x1a8] sm:$0xf] %v1311
                %v1313 = vld [vmem:[%s1255 + $0x70] sm:$0xf]
                %1314 = vst [vmem:[%s1256 + $0x1c0] sm:$0xf] %v1313
                %v1315 = vld [vmem:[%s1255 + $0x74] sm:$0xf]
                %1316 = vst [vmem:[%s1256 + $0x1c8] sm:$0xf] %v1315
                %v1317 = vld [vmem:[%s1255 + $0x78] sm:$0xf]
                %1318 = vst [vmem:[%s1256 + $0x1e0] sm:$0xf] %v1317
                %v1319 = vld [vmem:[%s1255 + $0x7c] sm:$0xf]
                %1320 = vst [vmem:[%s1256 + $0x1e8] sm:$0xf] %v1319
              $region49: #{decoder_block_forward.2} parent=43 // loop_footer
                %s1254 = sadd.s32 1, %s1250
              $region50: #{decoder_block_forward.2} parent=43 // loop_footer_branch
                %1249 = sbr.rel target = $region46
              $region51: #{decoder_block_forward.2} parent=43 // loop_exit
                _
            $region44: #{decoder_block_forward.2} parent=35 // pred_fallthru
              _
          $region36: #{decoder_block_forward.2} parent=31 // pred_fallthru
            _
          %1404 = vnop
        $region32: #{decoder_block_forward.2} parent=27 // pred_fallthru
          _
        // Predicated region
        $region70: #{decoder_block_forward.2} parent=27 // pred_check
          %p1405 = pneg %p151
        $region71: #{decoder_block_forward.2} parent=27 // pred_check_branch
          %1407 = sbr.rel (%p1405) target = $region73
        $region72: #{decoder_block_forward.2} parent=27 // pred_region
          _
        $region73: #{decoder_block_forward.2} parent=27 // pred_fallthru
          _
      $region28: #{decoder_block_forward.2} parent=5 // pred_fallthru
        _
      %p1408 = scmp.le.s32.totalorder 2, %s10
      // Predicated region
      $region74: #{decoder_block_forward.2} parent=5 // pred_check
        %p1409 = pneg %p1408
      $region75: #{decoder_block_forward.2} parent=5 // pred_check_branch
        %1411 = sbr.rel (%p1409) target = $region77
      $region76: #{decoder_block_forward.2} parent=5 // pred_region
        %s1412 = ssub.s32 %s10, 2
        // Predicated region
        $region78: #{decoder_block_forward.2} parent=76 // pred_check
          %p1413 = pneg %p125
        $region79: #{decoder_block_forward.2} parent=76 // pred_check_branch
          %1415 = sbr.rel (%p1413) target = $region81
        $region80: #{decoder_block_forward.2} parent=76 // pred_region
          %s1416 = sand.u32 %s110, 1
          %s1417 = sand.u32 %s110, 1
          %s1418 = smul.addr %s1417, 128
          %s1419 = scalar_lea.vmem [#allocation2], %s1418
        $region81: #{decoder_block_forward.2} parent=76 // pred_fallthru
          _
        // Predicated region
        $region82: #{decoder_block_forward.2} parent=76 // pred_check
          %p1420 = pneg %p157
        $region83: #{decoder_block_forward.2} parent=76 // pred_check_branch
          %1422 = sbr.rel (%p1420) target = $region85
        $region84: #{decoder_block_forward.2} parent=76 // pred_region
          %p1423 = scmp.lt.s32.totalorder %s25, 1
          %s1424 = scalar_select %p1423, %s25, 1
          %p1425 = scmp.lt.s32.totalorder %s27, 1
          %s1426 = scalar_select %p1425, %s27, 1
          %p1427 = scmp.lt.s32.totalorder %s26, 1
          %s1428 = scalar_select %p1427, %s26, 1
          %p1429 = scmp.lt.s32.totalorder %s28, 0
          %s1430 = scalar_select %p1429, %s28, 0
          %s1431 = sadd.s32 %s1430, %s1428
          %s1432 = smul.addr %s1426, 2
          %s1433 = sadd.s32 %s1431, %s1432
          %s1434 = smul.addr %s1424, 4
          %s1435 = sadd.s32 %s1433, %s1434
          %s1436 = smul.addr %s1435, 2
          %s1437 = scalar_lea.vmem %s3, %s1436
        $region85: #{decoder_block_forward.2} parent=76 // pred_fallthru
          _
      $region77: #{decoder_block_forward.2} parent=5 // pred_fallthru
        _
    $region6: #{decoder_block_forward.2} parent=1 // loop_footer
      %s14 = sadd.s32 1, %s10
    $region7: #{decoder_block_forward.2} parent=1 // loop_footer_branch
      %9 = sbr.rel target = $region3
    $region8: #{decoder_block_forward.2} parent=1 // loop_exit
      _

// kernel: decoder_block_forward.3
$region0: #{decoder_block_forward.3}
  #allocation0 [shape = 'u32[]', space=smem, size = 0x4, offset = 0x4, fixed_abs, tag = 'smem constant byte address 0x4 - core index']
  #allocation1 [shape = 'u32[144,128]{1,0:T(1,128)}', space=vmem, size = 0x12000, scoped, tag = 'internal scratch']
  %s0 = inlined_call_operand.vmem [shape: bf16[2,16,2,16,256], index: 0, kind: input, shape index: {}]
  %s1 = inlined_call_operand.vmem [shape: f32[2,2,256], index: 1, kind: input, shape index: {}]
  %s2 = inlined_call_operand.vmem [shape: bf16[2,16,2,16,256], index: 2, kind: output, shape index: {}]
  %s3 = sld [smem:[#allocation0]]
  $region41: #{decoder_block_forward.3} parent=0
    _
  %s5 = ssub.s32 1, %s3
  %s6 = scalar_select 0, %s5, %s3
  loop: start=0, step=1, limit=4
  $region2: #{decoder_block_forward.3} parent=0 // loop_pre_header
    _
  $region3: #{decoder_block_forward.3} parent=0 // loop_header
    %s8 = sphi 0, %s12
    %p9 = scmp.ge.s32.totalorder %s8, 4
    %s15 = sphi 0, %s27
    %s16 = sphi 0, %s23
    %s17 = sphi 0, %s15
    %s18 = sphi 0, %s16
    %s19 = sphi 0, %s17
    %s20 = sphi 0, %s18
    %s32 = sphi 0, %s34
    %s35 = sphi 0, %s32
    %s36 = sphi 0, %s35
    %s52 = sphi 0, %s36
    %s58 = sphi 0, %s60
    %s61 = sphi 0, %s58
    %s62 = sphi 0, %s61
    %s78 = sphi 0, %s62
    %s86 = sphi 0, %s88
    %s89 = sphi 0, %s86
    %s90 = sphi 0, %s89
    %s106 = sphi 0, %s90
  $region4: #{decoder_block_forward.3} parent=0 // loop_header_branch
    %11 = sbr.rel (%p9) target = $region8
  $region5: #{decoder_block_forward.3} parent=0 // loop_body
    %s13 = ssub.s32 %s8, 1
    %s14 = ssub.s32 %s8, 2
    %s21 = sadd.s32 1, %s16
    %p22 = scmp.ge.s32.totalorder %s21, 1
    %s23 = scalar_select %p22, 0, %s21
    %s24 = sadd.s32 1, %s15
    %s25 = scalar_select %p22, %s24, %s15
    %p26 = scmp.ge.s32.totalorder %s25, 2
    %s27 = scalar_select %p26, 0, %s25
    %s28 = ssub.s32 %s15, %s27
    %s29 = ssub.s32 %s16, %s23
    %s30 = sor.u32 %s28, %s29
    %p31 = scmp.eq.s32.totalorder %s30, 0
    %s33 = sadd.s32 %s32, 1
    %s34 = scalar_select %p31, %s32, %s33
    %p37 = pneg %p31
    %p38 = scmp.eq.s32.totalorder %s8, 1
    %p39 = por %p37, %p38
    %p40 = scmp.ne.s32.totalorder %s32, %s35
    %p41 = scmp.eq.s32.totalorder %s8, 0
    %p42 = por %p40, %p41
    %p43 = scmp.ne.s32.totalorder %s32, %s35
    %p44 = scmp.eq.s32.totalorder %s13, 1
    %p45 = por %p43, %p44
    %p46 = scmp.ne.s32.totalorder %s35, %s36
    %p47 = scmp.eq.s32.totalorder %s13, 0
    %p48 = por %p46, %p47
    %p49 = scmp.ne.s32.totalorder %s35, %s36
    %p50 = scmp.eq.s32.totalorder %s14, 1
    %p51 = por %p49, %p50
    %p53 = scmp.ne.s32.totalorder %s36, %s52
    %p54 = scmp.eq.s32.totalorder %s14, 0
    %p55 = por %p53, %p54
    %s56 = ssub.s32 %s15, %s27
    %p57 = scmp.eq.s32.totalorder %s56, 0
    %s59 = sadd.s32 %s58, 1
    %s60 = scalar_select %p57, %s58, %s59
    %p63 = pneg %p57
    %p64 = scmp.eq.s32.totalorder %s8, 1
    %p65 = por %p63, %p64
    %p66 = scmp.ne.s32.totalorder %s58, %s61
    %p67 = scmp.eq.s32.totalorder %s8, 0
    %p68 = por %p66, %p67
    %p69 = scmp.ne.s32.totalorder %s58, %s61
    %p70 = scmp.eq.s32.totalorder %s13, 1
    %p71 = por %p69, %p70
    %p72 = scmp.ne.s32.totalorder %s61, %s62
    %p73 = scmp.eq.s32.totalorder %s13, 0
    %p74 = por %p72, %p73
    %p75 = scmp.ne.s32.totalorder %s61, %s62
    %p76 = scmp.eq.s32.totalorder %s14, 1
    %p77 = por %p75, %p76
    %p79 = scmp.ne.s32.totalorder %s62, %s78
    %p80 = scmp.eq.s32.totalorder %s14, 0
    %p81 = por %p79, %p80
    %s82 = ssub.s32 %s15, %s27
    %s83 = ssub.s32 %s16, %s23
    %s84 = sor.u32 %s82, %s83
    %p85 = scmp.eq.s32.totalorder %s84, 0
    %s87 = sadd.s32 %s86, 1
    %s88 = scalar_select %p85, %s86, %s87
    %p91 = pneg %p85
    %p92 = scmp.eq.s32.totalorder %s8, 1
    %p93 = por %p91, %p92
    %p94 = scmp.ne.s32.totalorder %s86, %s89
    %p95 = scmp.eq.s32.totalorder %s8, 0
    %p96 = por %p94, %p95
    %p97 = scmp.ne.s32.totalorder %s86, %s89
    %p98 = scmp.eq.s32.totalorder %s13, 1
    %p99 = por %p97, %p98
    %p100 = scmp.ne.s32.totalorder %s89, %s90
    %p101 = scmp.eq.s32.totalorder %s13, 0
    %p102 = por %p100, %p101
    %p103 = scmp.ne.s32.totalorder %s89, %s90
    %p104 = scmp.eq.s32.totalorder %s14, 1
    %p105 = por %p103, %p104
    %p107 = scmp.ne.s32.totalorder %s90, %s106
    %p108 = scmp.eq.s32.totalorder %s14, 0
    %p109 = por %p107, %p108
    %p110 = scmp.le.s32.totalorder 1, %s8
    %p111 = scmp.lt.s32.totalorder %s8, 3
    %p112 = pnand %p110, %p111
    %p113 = pneg %p112
    // Predicated region
    $region9: #{decoder_block_forward.3} parent=5 // pred_check
      _
    $region10: #{decoder_block_forward.3} parent=5 // pred_check_branch
      %115 = sbr.rel (%p112) target = $region12
    $region11: #{decoder_block_forward.3} parent=5 // pred_region
      %s116 = ssub.s32 %s8, 1
    $region12: #{decoder_block_forward.3} parent=5 // pred_fallthru
      _
    %p117 = scmp.lt.s32.totalorder %s8, 2
    // Predicated region
    $region13: #{decoder_block_forward.3} parent=5 // pred_check
      %p118 = pneg %p117
    $region14: #{decoder_block_forward.3} parent=5 // pred_check_branch
      %120 = sbr.rel (%p118) target = $region16
    $region15: #{decoder_block_forward.3} parent=5 // pred_region
      // Predicated region
      $region17: #{decoder_block_forward.3} parent=15 // pred_check
        %p121 = pneg %p42
      $region18: #{decoder_block_forward.3} parent=15 // pred_check_branch
        %123 = sbr.rel (%p121) target = $region20
      $region19: #{decoder_block_forward.3} parent=15 // pred_region
        %s124 = smul.u32 16, %s16
        %p125 = scmp.lt.s32.totalorder %s15, 1
        %s126 = scalar_select %p125, %s15, 1
        %p127 = scmp.lt.s32.totalorder %s124, 15
        %s128 = scalar_select %p127, %s124, 15
        %s129 = smul.addr %s128, 8
        %s130 = smul.addr %s126, 128
        %s131 = sadd.s32 %s129, %s130
        %s132 = smul.addr %s131, 4
        %s133 = scalar_lea.vmem %s0, %s132
        %s134 = smul.u32 16, %s16
      $region20: #{decoder_block_forward.3} parent=15 // pred_fallthru
        _
      // Predicated region
      $region21: #{decoder_block_forward.3} parent=15 // pred_check
        %p135 = pneg %p68
      $region22: #{decoder_block_forward.3} parent=15 // pred_check_branch
        %137 = sbr.rel (%p135) target = $region24
      $region23: #{decoder_block_forward.3} parent=15 // pred_region
        %p138 = scmp.lt.s32.totalorder %s15, 1
        %s139 = scalar_select %p138, %s15, 1
        %s140 = smul.addr %s139, 2
        %s141 = smul.addr %s140, 2
        %s142 = scalar_lea.vmem %s1, %s141
      $region24: #{decoder_block_forward.3} parent=15 // pred_fallthru
        _
    $region16: #{decoder_block_forward.3} parent=5 // pred_fallthru
      _
    %p143 = scmp.le.s32.totalorder 1, %s8
    %p144 = scmp.lt.s32.totalorder %s8, 3
    %p145 = pnand %p143, %p144
    %p146 = pneg %p145
    // Predicated region
    $region25: #{decoder_block_forward.3} parent=5 // pred_check
      _
    $region26: #{decoder_block_forward.3} parent=5 // pred_check_branch
      %148 = sbr.rel (%p145) target = $region28
    $region27: #{decoder_block_forward.3} parent=5 // pred_region
      %s149 = ssub.s32 %s8, 1
      %s150 = smul.u32 16, %s18
      %p151 = scmp.lt.s32.totalorder %s17, 1
      %s152 = scalar_select %p151, %s17, 1
      %p153 = scmp.lt.s32.totalorder %s150, 15
      %s154 = scalar_select %p153, %s150, 15
      %s155 = smul.addr %s154, 8
      %s156 = smul.addr %s152, 128
      %s157 = sadd.s32 %s155, %s156
      %s158 = smul.addr %s157, 4
      %s159 = scalar_lea.vmem %s0, %s158
      %p160 = pneg %p48
      %p161 = pneg %p45
      %p162 = scmp.lt.s32.totalorder %s17, 1
      %s163 = scalar_select %p162, %s17, 1
      %s164 = smul.addr %s163, 2
      %s165 = smul.addr %s164, 2
      %s166 = scalar_lea.vmem %s1, %s165
      %p167 = pneg %p74
      %p168 = pneg %p71
      %p169 = pneg %p102
      %p170 = pneg %p99
      %s171 = smul.u32 16, %s18
      %p172 = scmp.lt.s32.totalorder %s17, 1
      %s173 = scalar_select %p172, %s17, 1
      %p174 = scmp.lt.s32.totalorder %s171, 15
      %s175 = scalar_select %p174, %s171, 15
      %s176 = smul.addr %s175, 8
      %s177 = smul.addr %s173, 128
      %s178 = sadd.s32 %s176, %s177
      %s179 = smul.addr %s178, 4
      %s180 = scalar_lea.vmem %s2, %s179
      %s181 = smul.u32 16, %s18
      %p182 = scmp.lt.s32.totalorder %s17, 1
      %s183 = scalar_select %p182, %s17, 1
      %p184 = scmp.lt.s32.totalorder %s181, 15
      %s185 = scalar_select %p184, %s181, 15
      %s186 = smul.addr %s185, 8
      %s187 = smul.addr %s183, 128
      %s188 = sadd.s32 %s186, %s187
      %s189 = smul.addr %s188, 4
      %s190 = scalar_lea.vmem %s0, %s189
      %s191 = smul.u32 16, %s18
      %p192 = scmp.lt.s32.totalorder %s17, 1
      %s193 = scalar_select %p192, %s17, 1
      %s194 = smul.addr %s193, 2
      %s195 = smul.addr %s194, 2
      %s196 = scalar_lea.vmem %s1, %s195
      %s197 = smul.u32 16, %s18
      %p198 = scmp.lt.s32.totalorder %s17, 1
      %s199 = scalar_select %p198, %s17, 1
      %p200 = scmp.lt.s32.totalorder %s197, 15
      %s201 = scalar_select %p200, %s197, 15
      %s202 = smul.addr %s201, 8
      %s203 = smul.addr %s199, 128
      %s204 = sadd.s32 %s202, %s203
      %s205 = smul.addr %s204, 4
      %s206 = scalar_lea.vmem %s2, %s205
      %s207 = smul.u32 16, %s18
      %v208 = vld [vmem:[%s190] sm:$0xff]
      %v209 = vld [vmem:[%s190 + $0x8] sm:$0xff]
      %v210 = vld [vmem:[%s190 + $0x10] sm:$0xff]
      %v211 = vld [vmem:[%s190 + $0x18] sm:$0xff]
      %v212 = vld [vmem:[%s190 + $0x20] sm:$0xff]
      %v213 = vld [vmem:[%s190 + $0x28] sm:$0xff]
      %v214 = vld [vmem:[%s190 + $0x30] sm:$0xff]
      %v215 = vld [vmem:[%s190 + $0x38] sm:$0xff]
      %v216 = vld [vmem:[%s190 + $0x40] sm:$0xff]
      %v217 = vld [vmem:[%s190 + $0x48] sm:$0xff]
      %v218 = vld [vmem:[%s190 + $0x50] sm:$0xff]
      %v219 = vld [vmem:[%s190 + $0x58] sm:$0xff]
      %v220 = vld [vmem:[%s190 + $0x60] sm:$0xff]
      %v221 = vld [vmem:[%s190 + $0x68] sm:$0xff]
      %v222 = vld [vmem:[%s190 + $0x70] sm:$0xff]
      %v223 = vld [vmem:[%s190 + $0x78] sm:$0xff]
      %v224 = vld [vmem:[%s190 + $0x80] sm:$0xff]
      %v225 = vld [vmem:[%s190 + $0x88] sm:$0xff]
      %v226 = vld [vmem:[%s190 + $0x90] sm:$0xff]
      %v227 = vld [vmem:[%s190 + $0x98] sm:$0xff]
      %v228 = vld [vmem:[%s190 + $0xa0] sm:$0xff]
      %v229 = vld [vmem:[%s190 + $0xa8] sm:$0xff]
      %v230 = vld [vmem:[%s190 + $0xb0] sm:$0xff]
      %v231 = vld [vmem:[%s190 + $0xb8] sm:$0xff]
      %v232 = vld [vmem:[%s190 + $0xc0] sm:$0xff]
      %v233 = vld [vmem:[%s190 + $0xc8] sm:$0xff]
      %v234 = vld [vmem:[%s190 + $0xd0] sm:$0xff]
      %v235 = vld [vmem:[%s190 + $0xd8] sm:$0xff]
      %v236 = vld [vmem:[%s190 + $0xe0] sm:$0xff]
      %v237 = vld [vmem:[%s190 + $0xe8] sm:$0xff]
      %v238 = vld [vmem:[%s190 + $0xf0] sm:$0xff]
      %v239 = vld [vmem:[%s190 + $0xf8] sm:$0xff]
      %v240 = vld [vmem:[%s190 + $0x100] sm:$0xff]
      %v241 = vld [vmem:[%s190 + $0x108] sm:$0xff]
      %v242 = vld [vmem:[%s190 + $0x110] sm:$0xff]
      %v243 = vld [vmem:[%s190 + $0x118] sm:$0xff]
      %v244 = vld [vmem:[%s190 + $0x120] sm:$0xff]
      %v245 = vld [vmem:[%s190 + $0x128] sm:$0xff]
      %v246 = vld [vmem:[%s190 + $0x130] sm:$0xff]
      %v247 = vld [vmem:[%s190 + $0x138] sm:$0xff]
      %v248 = vld [vmem:[%s190 + $0x140] sm:$0xff]
      %v249 = vld [vmem:[%s190 + $0x148] sm:$0xff]
      %v250 = vld [vmem:[%s190 + $0x150] sm:$0xff]
      %v251 = vld [vmem:[%s190 + $0x158] sm:$0xff]
      %v252 = vld [vmem:[%s190 + $0x160] sm:$0xff]
      %v253 = vld [vmem:[%s190 + $0x168] sm:$0xff]
      %v254 = vld [vmem:[%s190 + $0x170] sm:$0xff]
      %v255 = vld [vmem:[%s190 + $0x178] sm:$0xff]
      %v256 = vld [vmem:[%s190 + $0x180] sm:$0xff]
      %v257 = vld [vmem:[%s190 + $0x188] sm:$0xff]
      %v258 = vld [vmem:[%s190 + $0x190] sm:$0xff]
      %v259 = vld [vmem:[%s190 + $0x198] sm:$0xff]
      %v260 = vld [vmem:[%s190 + $0x1a0] sm:$0xff]
      %v261 = vld [vmem:[%s190 + $0x1a8] sm:$0xff]
      %v262 = vld [vmem:[%s190 + $0x1b0] sm:$0xff]
      %v263 = vld [vmem:[%s190 + $0x1b8] sm:$0xff]
      %v264 = vld [vmem:[%s190 + $0x1c0] sm:$0xff]
      %v265 = vld [vmem:[%s190 + $0x1c8] sm:$0xff]
      %v266 = vld [vmem:[%s190 + $0x1d0] sm:$0xff]
      %v267 = vld [vmem:[%s190 + $0x1d8] sm:$0xff]
      %v268 = vld [vmem:[%s190 + $0x1e0] sm:$0xff]
      %v269 = vld [vmem:[%s190 + $0x1e8] sm:$0xff]
      %v270 = vld [vmem:[%s190 + $0x1f0] sm:$0xff]
      %v271 = vld [vmem:[%s190 + $0x1f8] sm:$0xff]
      %v272 = vunpack.c.l.bf16 %v208
      %v273 = vunpack.c.h.bf16 %v208
      %v274 = vunpack.c.l.bf16 %v209
      %v275 = vunpack.c.h.bf16 %v209
      %v276 = vunpack.c.l.bf16 %v210
      %v277 = vunpack.c.h.bf16 %v210
      %v278 = vunpack.c.l.bf16 %v211
      %v279 = vunpack.c.h.bf16 %v211
      %v280 = vunpack.c.l.bf16 %v212
      %v281 = vunpack.c.h.bf16 %v212
      %v282 = vunpack.c.l.bf16 %v213
      %v283 = vunpack.c.h.bf16 %v213
      %v284 = vunpack.c.l.bf16 %v214
      %v285 = vunpack.c.h.bf16 %v214
      %v286 = vunpack.c.l.bf16 %v215
      %v287 = vunpack.c.h.bf16 %v215
      %v288 = vunpack.c.l.bf16 %v216
      %v289 = vunpack.c.h.bf16 %v216
      %v290 = vunpack.c.l.bf16 %v217
      %v291 = vunpack.c.h.bf16 %v217
      %v292 = vunpack.c.l.bf16 %v218
      %v293 = vunpack.c.h.bf16 %v218
      %v294 = vunpack.c.l.bf16 %v219
      %v295 = vunpack.c.h.bf16 %v219
      %v296 = vunpack.c.l.bf16 %v220
      %v297 = vunpack.c.h.bf16 %v220
      %v298 = vunpack.c.l.bf16 %v221
      %v299 = vunpack.c.h.bf16 %v221
      %v300 = vunpack.c.l.bf16 %v222
      %v301 = vunpack.c.h.bf16 %v222
      %v302 = vunpack.c.l.bf16 %v223
      %v303 = vunpack.c.h.bf16 %v223
      %v304 = vunpack.c.l.bf16 %v224
      %v305 = vunpack.c.h.bf16 %v224
      %v306 = vunpack.c.l.bf16 %v225
      %v307 = vunpack.c.h.bf16 %v225
      %v308 = vunpack.c.l.bf16 %v226
      %v309 = vunpack.c.h.bf16 %v226
      %v310 = vunpack.c.l.bf16 %v227
      %v311 = vunpack.c.h.bf16 %v227
      %v312 = vunpack.c.l.bf16 %v228
      %v313 = vunpack.c.h.bf16 %v228
      %v314 = vunpack.c.l.bf16 %v229
      %v315 = vunpack.c.h.bf16 %v229
      %v316 = vunpack.c.l.bf16 %v230
      %v317 = vunpack.c.h.bf16 %v230
      %v318 = vunpack.c.l.bf16 %v231
      %v319 = vunpack.c.h.bf16 %v231
      %v320 = vunpack.c.l.bf16 %v232
      %v321 = vunpack.c.h.bf16 %v232
      %v322 = vunpack.c.l.bf16 %v233
      %v323 = vunpack.c.h.bf16 %v233
      %v324 = vunpack.c.l.bf16 %v234
      %v325 = vunpack.c.h.bf16 %v234
      %v326 = vunpack.c.l.bf16 %v235
      %v327 = vunpack.c.h.bf16 %v235
      %v328 = vunpack.c.l.bf16 %v236
      %v329 = vunpack.c.h.bf16 %v236
      %v330 = vunpack.c.l.bf16 %v237
      %v331 = vunpack.c.h.bf16 %v237
      %v332 = vunpack.c.l.bf16 %v238
      %v333 = vunpack.c.h.bf16 %v238
      %v334 = vunpack.c.l.bf16 %v239
      %v335 = vunpack.c.h.bf16 %v239
      %v336 = vunpack.c.l.bf16 %v240
      %v337 = vunpack.c.h.bf16 %v240
      %v338 = vunpack.c.l.bf16 %v241
      %v339 = vunpack.c.h.bf16 %v241
      %v340 = vunpack.c.l.bf16 %v242
      %v341 = vunpack.c.h.bf16 %v242
      %v342 = vunpack.c.l.bf16 %v243
      %v343 = vunpack.c.h.bf16 %v243
      %v344 = vunpack.c.l.bf16 %v244
      %v345 = vunpack.c.h.bf16 %v244
      %v346 = vunpack.c.l.bf16 %v245
      %v347 = vunpack.c.h.bf16 %v245
      %v348 = vunpack.c.l.bf16 %v246
      %v349 = vunpack.c.h.bf16 %v246
      %v350 = vunpack.c.l.bf16 %v247
      %v351 = vunpack.c.h.bf16 %v247
      %v352 = vunpack.c.l.bf16 %v248
      %v353 = vunpack.c.h.bf16 %v248
      %v354 = vunpack.c.l.bf16 %v249
      %v355 = vunpack.c.h.bf16 %v249
      %v356 = vunpack.c.l.bf16 %v250
      %v357 = vunpack.c.h.bf16 %v250
      %v358 = vunpack.c.l.bf16 %v251
      %v359 = vunpack.c.h.bf16 %v251
      %v360 = vunpack.c.l.bf16 %v252
      %v361 = vunpack.c.h.bf16 %v252
      %v362 = vunpack.c.l.bf16 %v253
      %v363 = vunpack.c.h.bf16 %v253
      %v364 = vunpack.c.l.bf16 %v254
      %v365 = vunpack.c.h.bf16 %v254
      %v366 = vunpack.c.l.bf16 %v255
      %v367 = vunpack.c.h.bf16 %v255
      %v368 = vunpack.c.l.bf16 %v256
      %v369 = vunpack.c.h.bf16 %v256
      %v370 = vunpack.c.l.bf16 %v257
      %v371 = vunpack.c.h.bf16 %v257
      %v372 = vunpack.c.l.bf16 %v258
      %v373 = vunpack.c.h.bf16 %v258
      %v374 = vunpack.c.l.bf16 %v259
      %v375 = vunpack.c.h.bf16 %v259
      %v376 = vunpack.c.l.bf16 %v260
      %v377 = vunpack.c.h.bf16 %v260
      %v378 = vunpack.c.l.bf16 %v261
      %v379 = vunpack.c.h.bf16 %v261
      %v380 = vunpack.c.l.bf16 %v262
      %v381 = vunpack.c.h.bf16 %v262
      %v382 = vunpack.c.l.bf16 %v263
      %v383 = vunpack.c.h.bf16 %v263
      %v384 = vunpack.c.l.bf16 %v264
      %v385 = vunpack.c.h.bf16 %v264
      %v386 = vunpack.c.l.bf16 %v265
      %v387 = vunpack.c.h.bf16 %v265
      %v388 = vunpack.c.l.bf16 %v266
      %v389 = vunpack.c.h.bf16 %v266
      %v390 = vunpack.c.l.bf16 %v267
      %v391 = vunpack.c.h.bf16 %v267
      %v392 = vunpack.c.l.bf16 %v268
      %v393 = vunpack.c.h.bf16 %v268
      %v394 = vunpack.c.l.bf16 %v269
      %v395 = vunpack.c.h.bf16 %v269
      %v396 = vunpack.c.l.bf16 %v270
      %v397 = vunpack.c.h.bf16 %v270
      %v398 = vunpack.c.l.bf16 %v271
      %v399 = vunpack.c.h.bf16 %v271
      %v400 = vld [vmem:[%s196] ss:$2 sm:$0x3]
      %v402 = vlaneseq
      %v403 = vshrl.u32 %v402, 7
      %v404 = vsub.s32 0, %v403
      %v405 = vrot.slane %v400, %v404
      %v406 = vlaneseq
      %v407 = vshrl.u32 %v406, 7
      %v408 = vsub.s32 1, %v407
      %v409 = vrot.slane %v400, %v408
      %v412 = vmul.f32 %v272, %v405
      %v413 = vmul.f32 %v273, %v409
      %v414 = vmul.f32 %v274, %v405
      %v415 = vmul.f32 %v275, %v409
      %v416 = vmul.f32 %v276, %v405
      %v417 = vmul.f32 %v277, %v409
      %v418 = vmul.f32 %v278, %v405
      %v419 = vmul.f32 %v279, %v409
      %v420 = vmul.f32 %v280, %v405
      %v421 = vmul.f32 %v281, %v409
      %v422 = vmul.f32 %v282, %v405
      %v423 = vmul.f32 %v283, %v409
      %v424 = vmul.f32 %v284, %v405
      %v425 = vmul.f32 %v285, %v409
      %v426 = vmul.f32 %v286, %v405
      %v427 = vmul.f32 %v287, %v409
      %v428 = vmul.f32 %v288, %v405
      %v429 = vmul.f32 %v289, %v409
      %v430 = vmul.f32 %v290, %v405
      %v431 = vmul.f32 %v291, %v409
      %v432 = vmul.f32 %v292, %v405
      %v433 = vmul.f32 %v293, %v409
      %v434 = vmul.f32 %v294, %v405
      %v435 = vmul.f32 %v295, %v409
      %v436 = vmul.f32 %v296, %v405
      %v437 = vmul.f32 %v297, %v409
      %v438 = vmul.f32 %v298, %v405
      %v439 = vmul.f32 %v299, %v409
      %v440 = vmul.f32 %v300, %v405
      %v441 = vmul.f32 %v301, %v409
      %v442 = vmul.f32 %v302, %v405
      %v443 = vmul.f32 %v303, %v409
      %v444 = vmul.f32 %v304, %v405
      %v445 = vmul.f32 %v305, %v409
      %v446 = vmul.f32 %v306, %v405
      %v447 = vmul.f32 %v307, %v409
      %v448 = vmul.f32 %v308, %v405
      %v449 = vmul.f32 %v309, %v409
      %v450 = vmul.f32 %v310, %v405
      %v451 = vmul.f32 %v311, %v409
      %v452 = vmul.f32 %v312, %v405
      %v453 = vmul.f32 %v313, %v409
      %v454 = vmul.f32 %v314, %v405
      %v455 = vmul.f32 %v315, %v409
      %v456 = vmul.f32 %v316, %v405
      %v457 = vmul.f32 %v317, %v409
      %v458 = vmul.f32 %v318, %v405
      %v459 = vmul.f32 %v319, %v409
      %v460 = vmul.f32 %v320, %v405
      %v461 = vmul.f32 %v321, %v409
      %v462 = vmul.f32 %v322, %v405
      %v463 = vmul.f32 %v323, %v409
      %v464 = vmul.f32 %v324, %v405
      %v465 = vmul.f32 %v325, %v409
      %v466 = vmul.f32 %v326, %v405
      %v467 = vmul.f32 %v327, %v409
      %v468 = vmul.f32 %v328, %v405
      %v469 = vmul.f32 %v329, %v409
      %v470 = vmul.f32 %v330, %v405
      %v471 = vmul.f32 %v331, %v409
      %v472 = vmul.f32 %v332, %v405
      %v473 = vmul.f32 %v333, %v409
      %v474 = vmul.f32 %v334, %v405
      %v475 = vmul.f32 %v335, %v409
      %v476 = vmul.f32 %v336, %v405
      %v477 = vmul.f32 %v337, %v409
      %v478 = vmul.f32 %v338, %v405
      %v479 = vmul.f32 %v339, %v409
      %v480 = vmul.f32 %v340, %v405
      %v481 = vmul.f32 %v341, %v409
      %v482 = vmul.f32 %v342, %v405
      %v483 = vmul.f32 %v343, %v409
      %v484 = vmul.f32 %v344, %v405
      %v485 = vmul.f32 %v345, %v409
      %v486 = vmul.f32 %v346, %v405
      %v487 = vmul.f32 %v347, %v409
      %v488 = vmul.f32 %v348, %v405
      %v489 = vmul.f32 %v349, %v409
      %v490 = vmul.f32 %v350, %v405
      %v491 = vmul.f32 %v351, %v409
      %v492 = vmul.f32 %v352, %v405
      %v493 = vmul.f32 %v353, %v409
      %v494 = vmul.f32 %v354, %v405
      %v495 = vmul.f32 %v355, %v409
      %v496 = vmul.f32 %v356, %v405
      %v497 = vmul.f32 %v357, %v409
      %v498 = vmul.f32 %v358, %v405
      %v499 = vmul.f32 %v359, %v409
      %v500 = vmul.f32 %v360, %v405
      %v501 = vmul.f32 %v361, %v409
      %v502 = vmul.f32 %v362, %v405
      %v503 = vmul.f32 %v363, %v409
      %v504 = vmul.f32 %v364, %v405
      %v505 = vmul.f32 %v365, %v409
      %v506 = vmul.f32 %v366, %v405
      %v507 = vmul.f32 %v367, %v409
      %v508 = vmul.f32 %v368, %v405
      %v509 = vmul.f32 %v369, %v409
      %v510 = vmul.f32 %v370, %v405
      %v511 = vmul.f32 %v371, %v409
      %v512 = vmul.f32 %v372, %v405
      %v513 = vmul.f32 %v373, %v409
      %v514 = vmul.f32 %v374, %v405
      %v515 = vmul.f32 %v375, %v409
      %v516 = vmul.f32 %v376, %v405
      %v517 = vmul.f32 %v377, %v409
      %v518 = vmul.f32 %v378, %v405
      %v519 = vmul.f32 %v379, %v409
      %v520 = vmul.f32 %v380, %v405
      %v521 = vmul.f32 %v381, %v409
      %v522 = vmul.f32 %v382, %v405
      %v523 = vmul.f32 %v383, %v409
      %v524 = vmul.f32 %v384, %v405
      %v525 = vmul.f32 %v385, %v409
      %v526 = vmul.f32 %v386, %v405
      %v527 = vmul.f32 %v387, %v409
      %v528 = vmul.f32 %v388, %v405
      %v529 = vmul.f32 %v389, %v409
      %v530 = vmul.f32 %v390, %v405
      %v531 = vmul.f32 %v391, %v409
      %v532 = vmul.f32 %v392, %v405
      %v533 = vmul.f32 %v393, %v409
      %v534 = vmul.f32 %v394, %v405
      %v535 = vmul.f32 %v395, %v409
      %v536 = vmul.f32 %v396, %v405
      %v537 = vmul.f32 %v397, %v409
      %v538 = vmul.f32 %v398, %v405
      %v539 = vmul.f32 %v399, %v409
      %s540 = scalar_lea.vmem %s196, 1
      %v541 = vld [vmem:[%s540] ss:$2 sm:$0x3]
      %v543 = vlaneseq
      %v544 = vshrl.u32 %v543, 7
      %v545 = vsub.s32 0, %v544
      %v546 = vrot.slane %v541, %v545
      %v547 = vlaneseq
      %v548 = vshrl.u32 %v547, 7
      %v549 = vsub.s32 1, %v548
      %v550 = vrot.slane %v541, %v549
      %v553 = vadd.f32 %v412, %v546
      %v554 = vadd.f32 %v413, %v550
      %v555 = vadd.f32 %v414, %v546
      %v556 = vadd.f32 %v415, %v550
      %v557 = vadd.f32 %v416, %v546
      %v558 = vadd.f32 %v417, %v550
      %v559 = vadd.f32 %v418, %v546
      %v560 = vadd.f32 %v419, %v550
      %v561 = vadd.f32 %v420, %v546
      %v562 = vadd.f32 %v421, %v550
      %v563 = vadd.f32 %v422, %v546
      %v564 = vadd.f32 %v423, %v550
      %v565 = vadd.f32 %v424, %v546
      %v566 = vadd.f32 %v425, %v550
      %v567 = vadd.f32 %v426, %v546
      %v568 = vadd.f32 %v427, %v550
      %v569 = vadd.f32 %v428, %v546
      %v570 = vadd.f32 %v429, %v550
      %v571 = vadd.f32 %v430, %v546
      %v572 = vadd.f32 %v431, %v550
      %v573 = vadd.f32 %v432, %v546
      %v574 = vadd.f32 %v433, %v550
      %v575 = vadd.f32 %v434, %v546
      %v576 = vadd.f32 %v435, %v550
      %v577 = vadd.f32 %v436, %v546
      %v578 = vadd.f32 %v437, %v550
      %v579 = vadd.f32 %v438, %v546
      %v580 = vadd.f32 %v439, %v550
      %v581 = vadd.f32 %v440, %v546
      %v582 = vadd.f32 %v441, %v550
      %v583 = vadd.f32 %v442, %v546
      %v584 = vadd.f32 %v443, %v550
      %v585 = vadd.f32 %v444, %v546
      %v586 = vadd.f32 %v445, %v550
      %v587 = vadd.f32 %v446, %v546
      %v588 = vadd.f32 %v447, %v550
      %v589 = vadd.f32 %v448, %v546
      %v590 = vadd.f32 %v449, %v550
      %v591 = vadd.f32 %v450, %v546
      %v592 = vadd.f32 %v451, %v550
      %v593 = vadd.f32 %v452, %v546
      %v594 = vadd.f32 %v453, %v550
      %v595 = vadd.f32 %v454, %v546
      %v596 = vadd.f32 %v455, %v550
      %v597 = vadd.f32 %v456, %v546
      %v598 = vadd.f32 %v457, %v550
      %v599 = vadd.f32 %v458, %v546
      %v600 = vadd.f32 %v459, %v550
      %v601 = vadd.f32 %v460, %v546
      %v602 = vadd.f32 %v461, %v550
      %v603 = vadd.f32 %v462, %v546
      %v604 = vadd.f32 %v463, %v550
      %v605 = vadd.f32 %v464, %v546
      %v606 = vadd.f32 %v465, %v550
      %v607 = vadd.f32 %v466, %v546
      %v608 = vadd.f32 %v467, %v550
      %v609 = vadd.f32 %v468, %v546
      %v610 = vadd.f32 %v469, %v550
      %v611 = vadd.f32 %v470, %v546
      %v612 = vadd.f32 %v471, %v550
      %v613 = vadd.f32 %v472, %v546
      %v614 = vadd.f32 %v473, %v550
      %v615 = vadd.f32 %v474, %v546
      %v616 = vadd.f32 %v475, %v550
      %v617 = vadd.f32 %v476, %v546
      %v618 = vadd.f32 %v477, %v550
      %v619 = vadd.f32 %v478, %v546
      %v620 = vadd.f32 %v479, %v550
      %v621 = vadd.f32 %v480, %v546
      %v622 = vadd.f32 %v481, %v550
      %v623 = vadd.f32 %v482, %v546
      %v624 = vadd.f32 %v483, %v550
      %v625 = vadd.f32 %v484, %v546
      %v626 = vadd.f32 %v485, %v550
      %v627 = vadd.f32 %v486, %v546
      %v628 = vadd.f32 %v487, %v550
      %v629 = vadd.f32 %v488, %v546
      %v630 = vadd.f32 %v489, %v550
      %v631 = vadd.f32 %v490, %v546
      %v632 = vadd.f32 %v491, %v550
      %v633 = vadd.f32 %v492, %v546
      %v634 = vadd.f32 %v493, %v550
      %v635 = vadd.f32 %v494, %v546
      %v636 = vadd.f32 %v495, %v550
      %v637 = vadd.f32 %v496, %v546
      %v638 = vadd.f32 %v497, %v550
      %v639 = vadd.f32 %v498, %v546
      %v640 = vadd.f32 %v499, %v550
      %v641 = vadd.f32 %v500, %v546
      %v642 = vadd.f32 %v501, %v550
      %v643 = vadd.f32 %v502, %v546
      %v644 = vadd.f32 %v503, %v550
      %v645 = vadd.f32 %v504, %v546
      %v646 = vadd.f32 %v505, %v550
      %v647 = vadd.f32 %v506, %v546
      %v648 = vadd.f32 %v507, %v550
      %v649 = vadd.f32 %v508, %v546
      %v650 = vadd.f32 %v509, %v550
      %v651 = vadd.f32 %v510, %v546
      %v652 = vadd.f32 %v511, %v550
      %v653 = vadd.f32 %v512, %v546
      %v654 = vadd.f32 %v513, %v550
      %v655 = vadd.f32 %v514, %v546
      %v656 = vadd.f32 %v515, %v550
      %v657 = vadd.f32 %v516, %v546
      %v658 = vadd.f32 %v517, %v550
      %v659 = vadd.f32 %v518, %v546
      %v660 = vadd.f32 %v519, %v550
      %v661 = vadd.f32 %v520, %v546
      %v662 = vadd.f32 %v521, %v550
      %v663 = vadd.f32 %v522, %v546
      %v664 = vadd.f32 %v523, %v550
      %v665 = vadd.f32 %v524, %v546
      %v666 = vadd.f32 %v525, %v550
      %v667 = vadd.f32 %v526, %v546
      %v668 = vadd.f32 %v527, %v550
      %v669 = vadd.f32 %v528, %v546
      %v670 = vadd.f32 %v529, %v550
      %v671 = vadd.f32 %v530, %v546
      %v672 = vadd.f32 %v531, %v550
      %v673 = vadd.f32 %v532, %v546
      %v674 = vadd.f32 %v533, %v550
      %v675 = vadd.f32 %v534, %v546
      %v676 = vadd.f32 %v535, %v550
      %v677 = vadd.f32 %v536, %v546
      %v678 = vadd.f32 %v537, %v550
      %v679 = vadd.f32 %v538, %v546
      %v680 = vadd.f32 %v539, %v550
      %v681 = vmax.f32 %v553, 0.0
      %v682 = vmax.f32 %v554, 0.0
      %v683 = vmax.f32 %v555, 0.0
      %v684 = vmax.f32 %v556, 0.0
      %v685 = vmax.f32 %v557, 0.0
      %v686 = vmax.f32 %v558, 0.0
      %v687 = vmax.f32 %v559, 0.0
      %v688 = vmax.f32 %v560, 0.0
      %v689 = vmax.f32 %v561, 0.0
      %v690 = vmax.f32 %v562, 0.0
      %v691 = vmax.f32 %v563, 0.0
      %v692 = vmax.f32 %v564, 0.0
      %v693 = vmax.f32 %v565, 0.0
      %v694 = vmax.f32 %v566, 0.0
      %v695 = vmax.f32 %v567, 0.0
      %v696 = vmax.f32 %v568, 0.0
      %v697 = vmax.f32 %v569, 0.0
      %v698 = vmax.f32 %v570, 0.0
      %v699 = vmax.f32 %v571, 0.0
      %v700 = vmax.f32 %v572, 0.0
      %v701 = vmax.f32 %v573, 0.0
      %v702 = vmax.f32 %v574, 0.0
      %v703 = vmax.f32 %v575, 0.0
      %v704 = vmax.f32 %v576, 0.0
      %v705 = vmax.f32 %v577, 0.0
      %v706 = vmax.f32 %v578, 0.0
      %v707 = vmax.f32 %v579, 0.0
      %v708 = vmax.f32 %v580, 0.0
      %v709 = vmax.f32 %v581, 0.0
      %v710 = vmax.f32 %v582, 0.0
      %v711 = vmax.f32 %v583, 0.0
      %v712 = vmax.f32 %v584, 0.0
      %v713 = vmax.f32 %v585, 0.0
      %v714 = vmax.f32 %v586, 0.0
      %v715 = vmax.f32 %v587, 0.0
      %v716 = vmax.f32 %v588, 0.0
      %v717 = vmax.f32 %v589, 0.0
      %v718 = vmax.f32 %v590, 0.0
      %v719 = vmax.f32 %v591, 0.0
      %v720 = vmax.f32 %v592, 0.0
      %v721 = vmax.f32 %v593, 0.0
      %v722 = vmax.f32 %v594, 0.0
      %v723 = vmax.f32 %v595, 0.0
      %v724 = vmax.f32 %v596, 0.0
      %v725 = vmax.f32 %v597, 0.0
      %v726 = vmax.f32 %v598, 0.0
      %v727 = vmax.f32 %v599, 0.0
      %v728 = vmax.f32 %v600, 0.0
      %v729 = vmax.f32 %v601, 0.0
      %v730 = vmax.f32 %v602, 0.0
      %v731 = vmax.f32 %v603, 0.0
      %v732 = vmax.f32 %v604, 0.0
      %v733 = vmax.f32 %v605, 0.0
      %v734 = vmax.f32 %v606, 0.0
      %v735 = vmax.f32 %v607, 0.0
      %v736 = vmax.f32 %v608, 0.0
      %v737 = vmax.f32 %v609, 0.0
      %v738 = vmax.f32 %v610, 0.0
      %v739 = vmax.f32 %v611, 0.0
      %v740 = vmax.f32 %v612, 0.0
      %v741 = vmax.f32 %v613, 0.0
      %v742 = vmax.f32 %v614, 0.0
      %v743 = vmax.f32 %v615, 0.0
      %v744 = vmax.f32 %v616, 0.0
      %v745 = vmax.f32 %v617, 0.0
      %v746 = vmax.f32 %v618, 0.0
      %v747 = vmax.f32 %v619, 0.0
      %v748 = vmax.f32 %v620, 0.0
      %v749 = vmax.f32 %v621, 0.0
      %v750 = vmax.f32 %v622, 0.0
      %v751 = vmax.f32 %v623, 0.0
      %v752 = vmax.f32 %v624, 0.0
      %v753 = vmax.f32 %v625, 0.0
      %v754 = vmax.f32 %v626, 0.0
      %v755 = vmax.f32 %v627, 0.0
      %v756 = vmax.f32 %v628, 0.0
      %v757 = vmax.f32 %v629, 0.0
      %v758 = vmax.f32 %v630, 0.0
      %v759 = vmax.f32 %v631, 0.0
      %v760 = vmax.f32 %v632, 0.0
      %v761 = vmax.f32 %v633, 0.0
      %v762 = vmax.f32 %v634, 0.0
      %v763 = vmax.f32 %v635, 0.0
      %v764 = vmax.f32 %v636, 0.0
      %v765 = vmax.f32 %v637, 0.0
      %v766 = vmax.f32 %v638, 0.0
      %v767 = vmax.f32 %v639, 0.0
      %v768 = vmax.f32 %v640, 0.0
      %v769 = vmax.f32 %v641, 0.0
      %v770 = vmax.f32 %v642, 0.0
      %v771 = vmax.f32 %v643, 0.0
      %v772 = vmax.f32 %v644, 0.0
      %v773 = vmax.f32 %v645, 0.0
      %v774 = vmax.f32 %v646, 0.0
      %v775 = vmax.f32 %v647, 0.0
      %v776 = vmax.f32 %v648, 0.0
      %v777 = vmax.f32 %v649, 0.0
      %v778 = vmax.f32 %v650, 0.0
      %v779 = vmax.f32 %v651, 0.0
      %v780 = vmax.f32 %v652, 0.0
      %v781 = vmax.f32 %v653, 0.0
      %v782 = vmax.f32 %v654, 0.0
      %v783 = vmax.f32 %v655, 0.0
      %v784 = vmax.f32 %v656, 0.0
      %v785 = vmax.f32 %v657, 0.0
      %v786 = vmax.f32 %v658, 0.0
      %v787 = vmax.f32 %v659, 0.0
      %v788 = vmax.f32 %v660, 0.0
      %v789 = vmax.f32 %v661, 0.0
      %v790 = vmax.f32 %v662, 0.0
      %v791 = vmax.f32 %v663, 0.0
      %v792 = vmax.f32 %v664, 0.0
      %v793 = vmax.f32 %v665, 0.0
      %v794 = vmax.f32 %v666, 0.0
      %v795 = vmax.f32 %v667, 0.0
      %v796 = vmax.f32 %v668, 0.0
      %v797 = vmax.f32 %v669, 0.0
      %v798 = vmax.f32 %v670, 0.0
      %v799 = vmax.f32 %v671, 0.0
      %v800 = vmax.f32 %v672, 0.0
      %v801 = vmax.f32 %v673, 0.0
      %v802 = vmax.f32 %v674, 0.0
      %v803 = vmax.f32 %v675, 0.0
      %v804 = vmax.f32 %v676, 0.0
      %v805 = vmax.f32 %v677, 0.0
      %v806 = vmax.f32 %v678, 0.0
      %v807 = vmax.f32 %v679, 0.0
      %v808 = vmax.f32 %v680, 0.0
      %v809 = vpack.c.bf16 %v683, %v681
      %v810 = vpack.c.bf16 %v684, %v682
      %v811 = vpack.c.bf16 %v687, %v685
      %v812 = vpack.c.bf16 %v688, %v686
      %v813 = vpack.c.bf16 %v691, %v689
      %v814 = vpack.c.bf16 %v692, %v690
      %v815 = vpack.c.bf16 %v695, %v693
      %v816 = vpack.c.bf16 %v696, %v694
      %v817 = vpack.c.bf16 %v699, %v697
      %v818 = vpack.c.bf16 %v700, %v698
      %v819 = vpack.c.bf16 %v703, %v701
      %v820 = vpack.c.bf16 %v704, %v702
      %v821 = vpack.c.bf16 %v707, %v705
      %v822 = vpack.c.bf16 %v708, %v706
      %v823 = vpack.c.bf16 %v711, %v709
      %v824 = vpack.c.bf16 %v712, %v710
      %v825 = vpack.c.bf16 %v715, %v713
      %v826 = vpack.c.bf16 %v716, %v714
      %v827 = vpack.c.bf16 %v719, %v717
      %v828 = vpack.c.bf16 %v720, %v718
      %v829 = vpack.c.bf16 %v723, %v721
      %v830 = vpack.c.bf16 %v724, %v722
      %v831 = vpack.c.bf16 %v727, %v725
      %v832 = vpack.c.bf16 %v728, %v726
      %v833 = vpack.c.bf16 %v731, %v729
      %v834 = vpack.c.bf16 %v732, %v730
      %v835 = vpack.c.bf16 %v735, %v733
      %v836 = vpack.c.bf16 %v736, %v734
      %v837 = vpack.c.bf16 %v739, %v737
      %v838 = vpack.c.bf16 %v740, %v738
      %v839 = vpack.c.bf16 %v743, %v741
      %v840 = vpack.c.bf16 %v744, %v742
      %v841 = vpack.c.bf16 %v747, %v745
      %v842 = vpack.c.bf16 %v748, %v746
      %v843 = vpack.c.bf16 %v751, %v749
      %v844 = vpack.c.bf16 %v752, %v750
      %v845 = vpack.c.bf16 %v755, %v753
      %v846 = vpack.c.bf16 %v756, %v754
      %v847 = vpack.c.bf16 %v759, %v757
      %v848 = vpack.c.bf16 %v760, %v758
      %v849 = vpack.c.bf16 %v763, %v761
      %v850 = vpack.c.bf16 %v764, %v762
      %v851 = vpack.c.bf16 %v767, %v765
      %v852 = vpack.c.bf16 %v768, %v766
      %v853 = vpack.c.bf16 %v771, %v769
      %v854 = vpack.c.bf16 %v772, %v770
      %v855 = vpack.c.bf16 %v775, %v773
      %v856 = vpack.c.bf16 %v776, %v774
      %v857 = vpack.c.bf16 %v779, %v777
      %v858 = vpack.c.bf16 %v780, %v778
      %v859 = vpack.c.bf16 %v783, %v781
      %v860 = vpack.c.bf16 %v784, %v782
      %v861 = vpack.c.bf16 %v787, %v785
      %v862 = vpack.c.bf16 %v788, %v786
      %v863 = vpack.c.bf16 %v791, %v789
      %v864 = vpack.c.bf16 %v792, %v790
      %v865 = vpack.c.bf16 %v795, %v793
      %v866 = vpack.c.bf16 %v796, %v794
      %v867 = vpack.c.bf16 %v799, %v797
      %v868 = vpack.c.bf16 %v800, %v798
      %v869 = vpack.c.bf16 %v803, %v801
      %v870 = vpack.c.bf16 %v804, %v802
      %v871 = vpack.c.bf16 %v807, %v805
      %v872 = vpack.c.bf16 %v808, %v806
      %v937 = vunpack.c.l.b16 %v809
      %v938 = vunpack.c.l.b16 %v810
      %v939 = vunpack.c.h.b16 %v809
      %v940 = vunpack.c.h.b16 %v810
      %v941 = vunpack.c.l.b16 %v811
      %v942 = vunpack.c.l.b16 %v812
      %v943 = vunpack.c.h.b16 %v811
      %v944 = vunpack.c.h.b16 %v812
      %v945 = vunpack.c.l.b16 %v813
      %v946 = vunpack.c.l.b16 %v814
      %v947 = vunpack.c.h.b16 %v813
      %v948 = vunpack.c.h.b16 %v814
      %v949 = vunpack.c.l.b16 %v815
      %v950 = vunpack.c.l.b16 %v816
      %v951 = vunpack.c.h.b16 %v815
      %v952 = vunpack.c.h.b16 %v816
      %v953 = vunpack.c.l.b16 %v817
      %v954 = vunpack.c.l.b16 %v818
      %v955 = vunpack.c.h.b16 %v817
      %v956 = vunpack.c.h.b16 %v818
      %v957 = vunpack.c.l.b16 %v819
      %v958 = vunpack.c.l.b16 %v820
      %v959 = vunpack.c.h.b16 %v819
      %v960 = vunpack.c.h.b16 %v820
      %v961 = vunpack.c.l.b16 %v821
      %v962 = vunpack.c.l.b16 %v822
      %v963 = vunpack.c.h.b16 %v821
      %v964 = vunpack.c.h.b16 %v822
      %v965 = vunpack.c.l.b16 %v823
      %v966 = vunpack.c.l.b16 %v824
      %v967 = vunpack.c.h.b16 %v823
      %v968 = vunpack.c.h.b16 %v824
      %v969 = vunpack.c.l.b16 %v825
      %v970 = vunpack.c.l.b16 %v826
      %v971 = vunpack.c.h.b16 %v825
      %v972 = vunpack.c.h.b16 %v826
      %v973 = vunpack.c.l.b16 %v827
      %v974 = vunpack.c.l.b16 %v828
      %v975 = vunpack.c.h.b16 %v827
      %v976 = vunpack.c.h.b16 %v828
      %v977 = vunpack.c.l.b16 %v829
      %v978 = vunpack.c.l.b16 %v830
      %v979 = vunpack.c.h.b16 %v829
      %v980 = vunpack.c.h.b16 %v830
      %v981 = vunpack.c.l.b16 %v831
      %v982 = vunpack.c.l.b16 %v832
      %v983 = vunpack.c.h.b16 %v831
      %v984 = vunpack.c.h.b16 %v832
      %v985 = vunpack.c.l.b16 %v833
      %v986 = vunpack.c.l.b16 %v834
      %v987 = vunpack.c.h.b16 %v833
      %v988 = vunpack.c.h.b16 %v834
      %v989 = vunpack.c.l.b16 %v835
      %v990 = vunpack.c.l.b16 %v836
      %v991 = vunpack.c.h.b16 %v835
      %v992 = vunpack.c.h.b16 %v836
      %v993 = vunpack.c.l.b16 %v837
      %v994 = vunpack.c.l.b16 %v838
      %v995 = vunpack.c.h.b16 %v837
      %v996 = vunpack.c.h.b16 %v838
      %v997 = vunpack.c.l.b16 %v839
      %v998 = vunpack.c.l.b16 %v840
      %v999 = vunpack.c.h.b16 %v839
      %v1000 = vunpack.c.h.b16 %v840
      %v1001 = vunpack.c.l.b16 %v841
      %v1002 = vunpack.c.l.b16 %v842
      %v1003 = vunpack.c.h.b16 %v841
      %v1004 = vunpack.c.h.b16 %v842
      %v1005 = vunpack.c.l.b16 %v843
      %v1006 = vunpack.c.l.b16 %v844
      %v1007 = vunpack.c.h.b16 %v843
      %v1008 = vunpack.c.h.b16 %v844
      %v1009 = vunpack.c.l.b16 %v845
      %v1010 = vunpack.c.l.b16 %v846
      %v1011 = vunpack.c.h.b16 %v845
      %v1012 = vunpack.c.h.b16 %v846
      %v1013 = vunpack.c.l.b16 %v847
      %v1014 = vunpack.c.l.b16 %v848
      %v1015 = vunpack.c.h.b16 %v847
      %v1016 = vunpack.c.h.b16 %v848
      %v1017 = vunpack.c.l.b16 %v849
      %v1018 = vunpack.c.l.b16 %v850
      %v1019 = vunpack.c.h.b16 %v849
      %v1020 = vunpack.c.h.b16 %v850
      %v1021 = vunpack.c.l.b16 %v851
      %v1022 = vunpack.c.l.b16 %v852
      %v1023 = vunpack.c.h.b16 %v851
      %v1024 = vunpack.c.h.b16 %v852
      %v1025 = vunpack.c.l.b16 %v853
      %v1026 = vunpack.c.l.b16 %v854
      %v1027 = vunpack.c.h.b16 %v853
      %v1028 = vunpack.c.h.b16 %v854
      %v1029 = vunpack.c.l.b16 %v855
      %v1030 = vunpack.c.l.b16 %v856
      %v1031 = vunpack.c.h.b16 %v855
      %v1032 = vunpack.c.h.b16 %v856
      %v1033 = vunpack.c.l.b16 %v857
      %v1034 = vunpack.c.l.b16 %v858
      %v1035 = vunpack.c.h.b16 %v857
      %v1036 = vunpack.c.h.b16 %v858
      %v1037 = vunpack.c.l.b16 %v859
      %v1038 = vunpack.c.l.b16 %v860
      %v1039 = vunpack.c.h.b16 %v859
      %v1040 = vunpack.c.h.b16 %v860
      %v1041 = vunpack.c.l.b16 %v861
      %v1042 = vunpack.c.l.b16 %v862
      %v1043 = vunpack.c.h.b16 %v861
      %v1044 = vunpack.c.h.b16 %v862
      %v1045 = vunpack.c.l.b16 %v863
      %v1046 = vunpack.c.l.b16 %v864
      %v1047 = vunpack.c.h.b16 %v863
      %v1048 = vunpack.c.h.b16 %v864
      %v1049 = vunpack.c.l.b16 %v865
      %v1050 = vunpack.c.l.b16 %v866
      %v1051 = vunpack.c.h.b16 %v865
      %v1052 = vunpack.c.h.b16 %v866
      %v1053 = vunpack.c.l.b16 %v867
      %v1054 = vunpack.c.l.b16 %v868
      %v1055 = vunpack.c.h.b16 %v867
      %v1056 = vunpack.c.h.b16 %v868
      %v1057 = vunpack.c.l.b16 %v869
      %v1058 = vunpack.c.l.b16 %v870
      %v1059 = vunpack.c.h.b16 %v869
      %v1060 = vunpack.c.h.b16 %v870
      %v1061 = vunpack.c.l.b16 %v871
      %v1062 = vunpack.c.l.b16 %v872
      %v1063 = vunpack.c.h.b16 %v871
      %v1064 = vunpack.c.h.b16 %v872
      %v1065 = vpack.c.b16 %v938, %v937
      %v1066 = vpack.c.b16 %v940, %v939
      %v1067 = vpack.c.b16 %v942, %v941
      %v1068 = vpack.c.b16 %v944, %v943
      %v1069 = vpack.c.b16 %v946, %v945
      %v1070 = vpack.c.b16 %v948, %v947
      %v1071 = vpack.c.b16 %v950, %v949
      %v1072 = vpack.c.b16 %v952, %v951
      %v1073 = vpack.c.b16 %v954, %v953
      %v1074 = vpack.c.b16 %v956, %v955
      %v1075 = vpack.c.b16 %v958, %v957
      %v1076 = vpack.c.b16 %v960, %v959
      %v1077 = vpack.c.b16 %v962, %v961
      %v1078 = vpack.c.b16 %v964, %v963
      %v1079 = vpack.c.b16 %v966, %v965
      %v1080 = vpack.c.b16 %v968, %v967
      %v1081 = vpack.c.b16 %v970, %v969
      %v1082 = vpack.c.b16 %v972, %v971
      %v1083 = vpack.c.b16 %v974, %v973
      %v1084 = vpack.c.b16 %v976, %v975
      %v1085 = vpack.c.b16 %v978, %v977
      %v1086 = vpack.c.b16 %v980, %v979
      %v1087 = vpack.c.b16 %v982, %v981
      %v1088 = vpack.c.b16 %v984, %v983
      %v1089 = vpack.c.b16 %v986, %v985
      %v1090 = vpack.c.b16 %v988, %v987
      %v1091 = vpack.c.b16 %v990, %v989
      %v1092 = vpack.c.b16 %v992, %v991
      %v1093 = vpack.c.b16 %v994, %v993
      %v1094 = vpack.c.b16 %v996, %v995
      %v1095 = vpack.c.b16 %v998, %v997
      %v1096 = vpack.c.b16 %v1000, %v999
      %v1097 = vpack.c.b16 %v1002, %v1001
      %v1098 = vpack.c.b16 %v1004, %v1003
      %v1099 = vpack.c.b16 %v1006, %v1005
      %v1100 = vpack.c.b16 %v1008, %v1007
      %v1101 = vpack.c.b16 %v1010, %v1009
      %v1102 = vpack.c.b16 %v1012, %v1011
      %v1103 = vpack.c.b16 %v1014, %v1013
      %v1104 = vpack.c.b16 %v1016, %v1015
      %v1105 = vpack.c.b16 %v1018, %v1017
      %v1106 = vpack.c.b16 %v1020, %v1019
      %v1107 = vpack.c.b16 %v1022, %v1021
      %v1108 = vpack.c.b16 %v1024, %v1023
      %v1109 = vpack.c.b16 %v1026, %v1025
      %v1110 = vpack.c.b16 %v1028, %v1027
      %v1111 = vpack.c.b16 %v1030, %v1029
      %v1112 = vpack.c.b16 %v1032, %v1031
      %v1113 = vpack.c.b16 %v1034, %v1033
      %v1114 = vpack.c.b16 %v1036, %v1035
      %v1115 = vpack.c.b16 %v1038, %v1037
      %v1116 = vpack.c.b16 %v1040, %v1039
      %v1117 = vpack.c.b16 %v1042, %v1041
      %v1118 = vpack.c.b16 %v1044, %v1043
      %v1119 = vpack.c.b16 %v1046, %v1045
      %v1120 = vpack.c.b16 %v1048, %v1047
      %v1121 = vpack.c.b16 %v1050, %v1049
      %v1122 = vpack.c.b16 %v1052, %v1051
      %v1123 = vpack.c.b16 %v1054, %v1053
      %v1124 = vpack.c.b16 %v1056, %v1055
      %v1125 = vpack.c.b16 %v1058, %v1057
      %v1126 = vpack.c.b16 %v1060, %v1059
      %v1127 = vpack.c.b16 %v1062, %v1061
      %v1128 = vpack.c.b16 %v1064, %v1063
      %1193 = vst [vmem:[%s206] sm:$0xff] %v1065
      %1194 = vst [vmem:[%s206 + $0x8] sm:$0xff] %v1066
      %1195 = vst [vmem:[%s206 + $0x10] sm:$0xff] %v1067
      %1196 = vst [vmem:[%s206 + $0x18] sm:$0xff] %v1068
      %1197 = vst [vmem:[%s206 + $0x20] sm:$0xff] %v1069
      %1198 = vst [vmem:[%s206 + $0x28] sm:$0xff] %v1070
      %1199 = vst [vmem:[%s206 + $0x30] sm:$0xff] %v1071
      %1200 = vst [vmem:[%s206 + $0x38] sm:$0xff] %v1072
      %1201 = vst [vmem:[%s206 + $0x40] sm:$0xff] %v1073
      %1202 = vst [vmem:[%s206 + $0x48] sm:$0xff] %v1074
      %1203 = vst [vmem:[%s206 + $0x50] sm:$0xff] %v1075
      %1204 = vst [vmem:[%s206 + $0x58] sm:$0xff] %v1076
      %1205 = vst [vmem:[%s206 + $0x60] sm:$0xff] %v1077
      %1206 = vst [vmem:[%s206 + $0x68] sm:$0xff] %v1078
      %1207 = vst [vmem:[%s206 + $0x70] sm:$0xff] %v1079
      %1208 = vst [vmem:[%s206 + $0x78] sm:$0xff] %v1080
      %1209 = vst [vmem:[%s206 + $0x80] sm:$0xff] %v1081
      %1210 = vst [vmem:[%s206 + $0x88] sm:$0xff] %v1082
      %1211 = vst [vmem:[%s206 + $0x90] sm:$0xff] %v1083
      %1212 = vst [vmem:[%s206 + $0x98] sm:$0xff] %v1084
      %1213 = vst [vmem:[%s206 + $0xa0] sm:$0xff] %v1085
      %1214 = vst [vmem:[%s206 + $0xa8] sm:$0xff] %v1086
      %1215 = vst [vmem:[%s206 + $0xb0] sm:$0xff] %v1087
      %1216 = vst [vmem:[%s206 + $0xb8] sm:$0xff] %v1088
      %1217 = vst [vmem:[%s206 + $0xc0] sm:$0xff] %v1089
      %1218 = vst [vmem:[%s206 + $0xc8] sm:$0xff] %v1090
      %1219 = vst [vmem:[%s206 + $0xd0] sm:$0xff] %v1091
      %1220 = vst [vmem:[%s206 + $0xd8] sm:$0xff] %v1092
      %1221 = vst [vmem:[%s206 + $0xe0] sm:$0xff] %v1093
      %1222 = vst [vmem:[%s206 + $0xe8] sm:$0xff] %v1094
      %1223 = vst [vmem:[%s206 + $0xf0] sm:$0xff] %v1095
      %1224 = vst [vmem:[%s206 + $0xf8] sm:$0xff] %v1096
      %1225 = vst [vmem:[%s206 + $0x100] sm:$0xff] %v1097
      %1226 = vst [vmem:[%s206 + $0x108] sm:$0xff] %v1098
      %1227 = vst [vmem:[%s206 + $0x110] sm:$0xff] %v1099
      %1228 = vst [vmem:[%s206 + $0x118] sm:$0xff] %v1100
      %1229 = vst [vmem:[%s206 + $0x120] sm:$0xff] %v1101
      %1230 = vst [vmem:[%s206 + $0x128] sm:$0xff] %v1102
      %1231 = vst [vmem:[%s206 + $0x130] sm:$0xff] %v1103
      %1232 = vst [vmem:[%s206 + $0x138] sm:$0xff] %v1104
      %1233 = vst [vmem:[%s206 + $0x140] sm:$0xff] %v1105
      %1234 = vst [vmem:[%s206 + $0x148] sm:$0xff] %v1106
      %1235 = vst [vmem:[%s206 + $0x150] sm:$0xff] %v1107
      %1236 = vst [vmem:[%s206 + $0x158] sm:$0xff] %v1108
      %1237 = vst [vmem:[%s206 + $0x160] sm:$0xff] %v1109
      %1238 = vst [vmem:[%s206 + $0x168] sm:$0xff] %v1110
      %1239 = vst [vmem:[%s206 + $0x170] sm:$0xff] %v1111
      %1240 = vst [vmem:[%s206 + $0x178] sm:$0xff] %v1112
      %1241 = vst [vmem:[%s206 + $0x180] sm:$0xff] %v1113
      %1242 = vst [vmem:[%s206 + $0x188] sm:$0xff] %v1114
      %1243 = vst [vmem:[%s206 + $0x190] sm:$0xff] %v1115
      %1244 = vst [vmem:[%s206 + $0x198] sm:$0xff] %v1116
      %1245 = vst [vmem:[%s206 + $0x1a0] sm:$0xff] %v1117
      %1246 = vst [vmem:[%s206 + $0x1a8] sm:$0xff] %v1118
      %1247 = vst [vmem:[%s206 + $0x1b0] sm:$0xff] %v1119
      %1248 = vst [vmem:[%s206 + $0x1b8] sm:$0xff] %v1120
      %1249 = vst [vmem:[%s206 + $0x1c0] sm:$0xff] %v1121
      %1250 = vst [vmem:[%s206 + $0x1c8] sm:$0xff] %v1122
      %1251 = vst [vmem:[%s206 + $0x1d0] sm:$0xff] %v1123
      %1252 = vst [vmem:[%s206 + $0x1d8] sm:$0xff] %v1124
      %1253 = vst [vmem:[%s206 + $0x1e0] sm:$0xff] %v1125
      %1254 = vst [vmem:[%s206 + $0x1e8] sm:$0xff] %v1126
      %1255 = vst [vmem:[%s206 + $0x1f0] sm:$0xff] %v1127
      %1256 = vst [vmem:[%s206 + $0x1f8] sm:$0xff] %v1128
      %s1257 = smul.u32 16, %s18
      %p1258 = scmp.lt.s32.totalorder %s17, 1
      %s1259 = scalar_select %p1258, %s17, 1
      %p1260 = scmp.lt.s32.totalorder %s1257, 15
      %s1261 = scalar_select %p1260, %s1257, 15
      %s1262 = smul.addr %s1261, 8
      %s1263 = smul.addr %s1259, 128
      %s1264 = sadd.s32 %s1262, %s1263
      %s1265 = smul.addr %s1264, 4
      %s1266 = scalar_lea.vmem %s2, %s1265
      // Predicated region
      $region29: #{decoder_block_forward.3} parent=27 // pred_check
        %p1267 = pneg %p99
      $region30: #{decoder_block_forward.3} parent=27 // pred_check_branch
        %1269 = sbr.rel (%p1267) target = $region32
      $region31: #{decoder_block_forward.3} parent=27 // pred_region
        %s1270 = smul.u32 16, %s18
      $region32: #{decoder_block_forward.3} parent=27 // pred_fallthru
        _
    $region28: #{decoder_block_forward.3} parent=5 // pred_fallthru
      _
    %p1271 = scmp.le.s32.totalorder 2, %s8
    // Predicated region
    $region33: #{decoder_block_forward.3} parent=5 // pred_check
      %p1272 = pneg %p1271
    $region34: #{decoder_block_forward.3} parent=5 // pred_check_branch
      %1274 = sbr.rel (%p1272) target = $region36
    $region35: #{decoder_block_forward.3} parent=5 // pred_region
      %s1275 = ssub.s32 %s8, 2
      // Predicated region
      $region37: #{decoder_block_forward.3} parent=35 // pred_check
        %p1276 = pneg %p105
      $region38: #{decoder_block_forward.3} parent=35 // pred_check_branch
        %1278 = sbr.rel (%p1276) target = $region40
      $region39: #{decoder_block_forward.3} parent=35 // pred_region
        %s1279 = smul.u32 16, %s20
        %p1280 = scmp.lt.s32.totalorder %s19, 1
        %s1281 = scalar_select %p1280, %s19, 1
        %p1282 = scmp.lt.s32.totalorder %s1279, 15
        %s1283 = scalar_select %p1282, %s1279, 15
        %s1284 = smul.addr %s1283, 8
        %s1285 = smul.addr %s1281, 128
        %s1286 = sadd.s32 %s1284, %s1285
        %s1287 = smul.addr %s1286, 4
        %s1288 = scalar_lea.vmem %s2, %s1287
      $region40: #{decoder_block_forward.3} parent=35 // pred_fallthru
        _
    $region36: #{decoder_block_forward.3} parent=5 // pred_fallthru
      _
  $region6: #{decoder_block_forward.3} parent=0 // loop_footer
    %s12 = sadd.s32 1, %s8
  $region7: #{decoder_block_forward.3} parent=0 // loop_footer_branch
    %7 = sbr.rel target = $region3
  $region8: #{decoder_block_forward.3} parent=0 // loop_exit
    _

</llo_original>
